<compile_context>
chip_gen: v5e
topology: v5e:2x2
jax: 0.10.0
libtpu: 0.0.40
codegen_flags: <defaults>
</compile_context>

<pallas_src>
import functools
import math

import jax
import jax.numpy as jnp
from jax import lax
from jax.experimental import pallas as pl
from jax.experimental.pallas import tpu as pltpu


_LANE = 128


# ---------------------------------------------------------------------------
# Helpers
# ---------------------------------------------------------------------------

def _pick_tile(dim, max_tile, multiple):
    """Largest tile <= max_tile that divides `dim` and is a multiple of `multiple`.
    Falls back to the full dim, which is always a legal block size."""
    if dim <= max_tile:
        return dim
    t = (max_tile // multiple) * multiple
    while t >= multiple:
        if dim % t == 0:
            return t
        t -= multiple
    return dim


def _keep_mask_from_index(idx_u32, seed_u32, threshold):
    """Stateless counter-based PRNG (murmur3 fmix32). P(keep) = threshold / 2**24.
    Pure jnp ops -> identical result inside the kernel and in the JAX reference,
    and it lowers on both Mosaic and the CPU interpreter."""
    h = idx_u32 ^ (seed_u32 * jnp.uint32(0x9E3779B9))
    h = h ^ (h >> 16)
    h = h * jnp.uint32(0x85EBCA6B)
    h = h ^ (h >> 13)
    h = h * jnp.uint32(0xC2B2AE35)
    h = h ^ (h >> 16)
    return (h >> 8) < jnp.uint32(threshold)      # top 24 bits: uniform in [0, 2**24)


# ---------------------------------------------------------------------------
# Fused forward kernels
#   grid = (H // tn,): one feature tile of the hidden layer per step.
#   Per step:  (B,K) @ (K,tn)  -> BN -> ReLU -> Dropout -> (B,tn) @ (tn,128)
#   The (B,128) padded logits accumulate in an f32 VMEM scratch across tiles.
# ---------------------------------------------------------------------------

def _fused_train_kernel(seed_ref, x_ref, w1_ref, b1_ref, g_ref, be_ref,
                        w2_ref, b2_ref, out_ref, acc_ref, *,
                        eps, threshold, inv_keep, hidden):
    j = pl.program_id(0)

    @pl.when(j == 0)
    def _():
        acc_ref[...] = jnp.zeros_like(acc_ref)

    # ---- Linear1 tile: (B, tn).  Full-K weight tile is VMEM resident -> no
    #      K grid axis and no per-tile accumulator for this matmul.
    h = jnp.dot(x_ref[...], w1_ref[...], preferred_element_type=jnp.float32)
    h = h + b1_ref[...].astype(jnp.float32)

    # ---- BatchNorm1d (training: batch stats, torch.var-style unbiased variance).
    #      Exact because the batch axis is never tiled.
    nb = h.shape[0]
    mu = jnp.mean(h, axis=0, keepdims=True)
    diff = h - mu
    var = jnp.sum(diff * diff, axis=0, keepdims=True) / jnp.float32(nb - 1)
    inv = lax.rsqrt(var + jnp.float32(eps))
    h = g_ref[...].astype(jnp.float32) * (diff * inv) + be_ref[...].astype(jnp.float32)

    # ---- ReLU
    h = jnp.maximum(h, 0.0)

    # ---- Dropout: stateless hash of the global element index; seed from SMEM
    #      (scalar prefetch), so a new seed per step does not recompile.
    tn = h.shape[1]
    row = lax.broadcasted_iota(jnp.int32, h.shape, 0)
    col = lax.broadcasted_iota(jnp.int32, h.shape, 1)
    gidx = (row * hidden + (j * tn + col)).astype(jnp.uint32)
    keep = _keep_mask_from_index(gidx, seed_ref[0].astype(jnp.uint32), threshold)
    h = jnp.where(keep, h * jnp.float32(inv_keep), jnp.float32(0.0))

    # ---- Linear2 partial product, accumulated over feature tiles.
    acc_ref[...] += jnp.dot(h, w2_ref[...].astype(jnp.float32),
                            preferred_element_type=jnp.float32)

    @pl.when(j == pl.num_programs(0) - 1)
    def _():
        out_ref[...] = (acc_ref[...] + b2_ref[...].astype(jnp.float32)
                        ).astype(out_ref.dtype)


def _fused_eval_kernel(x_ref, w1_ref, b1_ref, g_ref, be_ref, rm_ref, rv_ref,
                       w2_ref, b2_ref, out_ref, acc_ref, *, eps):
    j = pl.program_id(0)

    @pl.when(j == 0)
    def _():
        acc_ref[...] = jnp.zeros_like(acc_ref)

    h = jnp.dot(x_ref[...], w1_ref[...], preferred_element_type=jnp.float32)
    h = h + b1_ref[...].astype(jnp.float32)
    inv = lax.rsqrt(rv_ref[...].astype(jnp.float32) + jnp.float32(eps))
    h = (g_ref[...].astype(jnp.float32)
         * ((h - rm_ref[...].astype(jnp.float32)) * inv)
         + be_ref[...].astype(jnp.float32))
    h = jnp.maximum(h, 0.0)                          # Dropout is identity in eval
    acc_ref[...] += jnp.dot(h, w2_ref[...].astype(jnp.float32),
                            preferred_element_type=jnp.float32)

    @pl.when(j == pl.num_programs(0) - 1)
    def _():
        out_ref[...] = (acc_ref[...] + b2_ref[...].astype(jnp.float32)
                        ).astype(out_ref.dtype)


# ---------------------------------------------------------------------------
# Wrappers
# ---------------------------------------------------------------------------

def init_model_params(key, hidden_features=1024, in_features=3072, num_classes=10,
                      dtype=jnp.float32):
    k1, k2 = jax.random.split(key)
    return {
        "w1": jax.random.normal(k1, (in_features, hidden_features), dtype)
              * (1.0 / math.sqrt(in_features)),
        "b1": jnp.zeros((hidden_features,), dtype),
        "gamma": jnp.ones((hidden_features,), dtype),
        "beta": jnp.zeros((hidden_features,), dtype),
        "running_mean": jnp.zeros((hidden_features,), jnp.float32),
        "running_var": jnp.ones((hidden_features,), jnp.float32),
        "w2": jax.random.normal(k2, (hidden_features, num_classes), dtype)
              * (1.0 / math.sqrt(hidden_features)),
        "b2": jnp.zeros((num_classes,), dtype),
    }


def model_logits(params, x, *, training=True, drop_rate=0.5, seed=0,
                 max_tn=512, eps=1e-5):
    """Fused Pallas forward: Linear1 + BN + ReLU + Dropout + Linear2 in one call."""
    B, K = x.shape
    Kw, H = params["w1"].shape
    assert K == Kw
    C = params["w2"].shape[1]

    # Pad the classifier to a full lane (128): lane-dense unmasked stores and a
    # sane MXU N dimension; the real classes are sliced back out below.
    CP = max(_LANE, pl.cdiv(C, _LANE) * _LANE)
    w2p = jnp.pad(params["w2"], ((0, 0), (0, CP - C)))
    b2p = jnp.pad(params["b2"], (0, CP - C)).reshape(1, CP)

    tn = _pick_tile(H, max_tn, _LANE)
    grid = (H // tn,)

    b1 = params["b1"].reshape(1, H)
    gamma = params["gamma"].reshape(1, H)
    beta = params["beta"].reshape(1, H)

    # Tile footprint (double-buffered) + headroom, capped below v7x's 64 MiB
    # physical VMEM.  Default tn=512: ~18 MiB, comfortably within budget on
    # every generation.
    est = 2 * 4 * (B * K + K * tn + tn * CP + B * CP + 6 * tn + CP) + (4 << 20)
    vmem_limit = int(min(max(est, 16 << 20), 48 << 20))

    if training:
        assert B > 1, "training-mode BatchNorm1d (unbiased var) needs batch size > 1"
        keep_prob = 1.0 - float(drop_rate)
        assert 0.0 < keep_prob <= 1.0, "dropout requires p in [0, 1)"
        threshold = max(0, min(1 << 24, int(round(keep_prob * float(1 << 24)))))
        inv_keep = 1.0 / keep_prob
        seed_arr = jnp.asarray([seed], dtype=jnp.int32)   # SMEM scalar prefetch

        grid_spec = pltpu.PrefetchScalarGridSpec(
            num_scalar_prefetch=1,
            grid=grid,
            in_specs=[
                pl.BlockSpec((B, K), lambda j, s: (0, 0)),    # x (full batch, full K)
                pl.BlockSpec((K, tn), lambda j, s: (0, j)),   # w1 feature tile
                pl.BlockSpec((1, tn), lambda j, s: (0, j)),   # b1
                pl.BlockSpec((1, tn), lambda j, s: (0, j)),   # gamma
                pl.BlockSpec((1, tn), lambda j, s: (0, j)),   # beta
                pl.BlockSpec((tn, CP), lambda j, s: (j, 0)),  # w2 (padded)
                pl.BlockSpec((1, CP), lambda j, s: (0, 0)),   # b2 (padded)
            ],
            out_specs=pl.BlockSpec((B, CP), lambda j, s: (0, 0)),
            scratch_shapes=[pltpu.VMEM((B, CP), jnp.float32)],
        )
        logits_p = pl.pallas_call(
            functools.partial(_fused_train_kernel, eps=eps, threshold=threshold,
                              inv_keep=inv_keep, hidden=H),
            out_shape=jax.ShapeDtypeStruct((B, CP), x.dtype),
            grid_spec=grid_spec,
            compiler_params=pltpu.CompilerParams(
                # The feature-tile axis is a reduction for the final logits
                # (the output block is revisited), so it must be "arbitrary".
                dimension_semantics=("arbitrary",),
                vmem_limit_bytes=vmem_limit),
        )(seed_arr, x, params["w1"], b1, gamma, beta, w2p, b2p)
    else:
        rm = params["running_mean"].astype(jnp.float32).reshape(1, H)
        rv = params["running_var"].astype(jnp.float32).reshape(1, H)
        logits_p = pl.pallas_call(
            functools.partial(_fused_eval_kernel, eps=eps),
            out_shape=jax.ShapeDtypeStruct((B, CP), x.dtype),
            grid=grid,
            in_specs=[
                pl.BlockSpec((B, K), lambda j: (0, 0)),
                pl.BlockSpec((K, tn), lambda j: (0, j)),
                pl.BlockSpec((1, tn), lambda j: (0, j)),
                pl.BlockSpec((1, tn), lambda j: (0, j)),
                pl.BlockSpec((1, tn), lambda j: (0, j)),
                pl.BlockSpec((1, tn), lambda j: (0, j)),
                pl.BlockSpec((1, tn), lambda j: (0, j)),
                pl.BlockSpec((tn, CP), lambda j: (j, 0)),
                pl.BlockSpec((1, CP), lambda j: (0, 0)),
            ],
            out_specs=pl.BlockSpec((B, CP), lambda j: (0, 0)),
            scratch_shapes=[pltpu.VMEM((B, CP), jnp.float32)],
            compiler_params=pltpu.CompilerParams(
                dimension_semantics=("arbitrary",),
                vmem_limit_bytes=vmem_limit),
        )(x, params["w1"], b1, gamma, beta, rm, rv, w2p, b2p)

    # NOTE: running mean/var buffer updates (incl. the original code's
    # `runnin_var` typo, i.e. running_var never actually updates) are stateful
    # host-side bookkeeping and do not affect the forward output.
    return logits_p[:, :C]


def model_forward(params, x, y=None, *, training=True, drop_rate=0.5, seed=0,
                  max_tn=512):
    """Mirrors Model.forward: returns pred if y is None else (loss, acc)."""
    logits = model_logits(params, x, training=training, drop_rate=drop_rate,
                          seed=seed, max_tn=max_tn)
    # TODO(synk): argmax / cross-entropy / accuracy epilogue kept in plain JAX —
    # tiny (batch, 10) tensors, not worth a Pallas kernel.
    pred = jnp.argmax(logits, axis=-1)
    if y is None:
        return pred
    zmax = jnp.max(logits, axis=-1, keepdims=True)
    logp = logits - (zmax + jnp.log(jnp.sum(jnp.exp(logits - zmax), axis=-1,
                                            keepdims=True)))
    loss = -jnp.mean(jnp.take_along_axis(logp, y[:, None], axis=-1))
    acc = jnp.mean((pred == y).astype(jnp.float32))
    return loss, acc


# ---------------------------------------------------------------------------
# Pure-JAX reference (same stateless hash -> identical dropout mask)
# ---------------------------------------------------------------------------

def _reference_logits(params, x, *, training, drop_rate, seed):
    h = x @ params["w1"] + params["b1"]
    if training:
        mu = jnp.mean(h, axis=0)
        var = jnp.var(h, axis=0, ddof=1)                   # torch.var default: unbiased
    else:
        mu, var = params["running_mean"], params["running_var"]
    h = params["gamma"] * ((h - mu) / jnp.sqrt(var + 1e-5)) + params["beta"]
    h = jnp.maximum(h, 0.0)
    if training:
        keep_prob = 1.0 - drop_rate
        threshold = int(round(keep_prob * float(1 << 24)))
        idx = jnp.arange(h.size, dtype=jnp.uint32).reshape(h.shape)
        keep = _keep_mask_from_index(idx, jnp.uint32(seed), threshold)
        h = jnp.where(keep, h * (1.0 / keep_prob), 0.0)
    return h @ params["w2"] + params["b2"]


if __name__ == "__main__":
    key = jax.random.PRNGKey(0)
    kx, kp, ky = jax.random.split(key, 3)

    batch, in_features, hidden, num_classes = 16, 3072, 256, 10
    drop_rate, seed = 0.5, 123

    x = jax.random.normal(kx, (batch, in_features), jnp.float32)
    y = jax.random.randint(ky, (batch,), 0, num_classes)
    params = init_model_params(kp, hidden_features=hidden,
                               in_features=in_features, num_classes=num_classes)

    # Training-mode fused forward.  max_tn=128 forces a 2-step feature-tile
    # grid so the logits-accumulation path is exercised at this small hidden.
    logits_train = jax.block_until_ready(
        model_logits(params, x, training=True, drop_rate=drop_rate, seed=seed,
                     max_tn=128))
    ref_train = _reference_logits(params, x, training=True,
                                  drop_rate=drop_rate, seed=seed)
    ok_train = bool(jnp.allclose(logits_train, ref_train, rtol=2e-3, atol=2e-3))

    # Eval-mode fused forward (running-stat BN, dropout = identity).
    logits_eval = jax.block_until_ready(model_logits(params, x, training=False))
    ref_eval = _reference_logits(params, x, training=False,
                                 drop_rate=drop_rate, seed=seed)
    ok_eval = bool(jnp.allclose(logits_eval, ref_eval, rtol=2e-3, atol=2e-3))

    # New seed must change the dropout mask without recompiling (SMEM scalar).
    logits_train2 = jax.block_until_ready(
        model_logits(params, x, training=True, drop_rate=drop_rate, seed=seed + 1,
                     max_tn=128))
    ok_seed = not bool(jnp.allclose(logits_train, logits_train2))

    # Model.forward return paths.
    pred = jax.block_until_ready(model_forward(params, x, training=False))
    loss, acc = jax.block_until_ready(
        model_forward(params, x, y, training=True, drop_rate=drop_rate, seed=seed))
    ok_shapes = (pred.shape == (batch,)) and (loss.shape == ()) and (acc.shape == ())
    ok_finite = bool(jnp.isfinite(loss)) and bool(jnp.isfinite(acc))

    if ok_train and ok_eval and ok_seed and ok_shapes and ok_finite:
        print("KERNEL_OK")
    else:
        print("KERNEL_MISMATCH")
</pallas_src>

<mosaic_0001>
module attributes {stable_mosaic.version = 11 : i64} {
  func.func @_fused_train_kernel(%arg0: i32, %arg1: memref<1xi32, #tpu.memory_space<smem>>, %arg2: memref<16x3072xf32, #tpu.memory_space<vmem>>, %arg3: memref<3072x128xf32, #tpu.memory_space<vmem>>, %arg4: memref<1x128xf32, #tpu.memory_space<vmem>>, %arg5: memref<1x128xf32, #tpu.memory_space<vmem>>, %arg6: memref<1x128xf32, #tpu.memory_space<vmem>>, %arg7: memref<128x128xf32, #tpu.memory_space<vmem>>, %arg8: memref<1x128xf32, #tpu.memory_space<vmem>>, %arg9: memref<16x128xf32, #tpu.memory_space<vmem>>, %arg10: memref<16x128xf32, #tpu.memory_space<vmem>>) attributes {dimension_semantics = [#tpu.dimension_semantics<arbitrary>], iteration_bounds = array<i64: 2>, scalar_prefetch = 1 : i64, scratch_operands = 1 : i64, tpu.core_type = #tpu.core_type<tc>, window_params = [{pipeline_mode = #tpu.pipeline_mode<synchronous>, transform_indices = @transform_0, window_bounds = array<i64: 16, 3072>}, {transform_indices = @transform_1, window_bounds = array<i64: 3072, 128>}, {transform_indices = @transform_2, window_bounds = array<i64: 1, 128>}, {transform_indices = @transform_3, window_bounds = array<i64: 1, 128>}, {transform_indices = @transform_4, window_bounds = array<i64: 1, 128>}, {transform_indices = @transform_5, window_bounds = array<i64: 128, 128>}, {pipeline_mode = #tpu.pipeline_mode<synchronous>, transform_indices = @transform_6, window_bounds = array<i64: 1, 128>}, {pipeline_mode = #tpu.pipeline_mode<synchronous>, transform_indices = @transform_7, window_bounds = array<i64: 16, 128>}]} {
    %c0_i32 = arith.constant 0 : i32
    %0 = arith.cmpi eq, %arg0, %c0_i32 : i32
    %1 = arith.extui %0 : i1 to i32
    %c0_i32_0 = arith.constant 0 : i32
    %2 = arith.cmpi ne, %1, %c0_i32_0 : i32
    scf.if %2 {
      %cst_28 = arith.constant 0.000000e+00 : f32
      %74 = vector.broadcast %cst_28 : f32 to vector<16x128xf32>
      %c0_29 = arith.constant 0 : index
      %c0_30 = arith.constant 0 : index
      %75 = vector.load %arg10[%c0_29, %c0_30] : memref<16x128xf32, #tpu.memory_space<vmem>>, vector<16x128xf32>
      tpu.vector_store %arg10[%c0_29, %c0_30], %74 {strides = array<i32>} : memref<16x128xf32, #tpu.memory_space<vmem>>, vector<16x128xf32>,
    } else {
    }
    %c0 = arith.constant 0 : index
    %c0_1 = arith.constant 0 : index
    %3 = vector.load %arg2[%c0, %c0_1] : memref<16x3072xf32, #tpu.memory_space<vmem>>, vector<16x3072xf32>
    %c0_2 = arith.constant 0 : index
    %c0_3 = arith.constant 0 : index
    %4 = vector.load %arg3[%c0_2, %c0_3] : memref<3072x128xf32, #tpu.memory_space<vmem>>, vector<3072x128xf32>
    %cst = arith.constant dense<0.000000e+00> : vector<16x128xf32>
    %5 = tpu.matmul %3, %4, %cst {dimension_numbers = #tpu.dot_dimension_numbers<[1], [0], [0], [1], [0, 0, 1, 1], [], []>} : vector<16x3072xf32>, vector<3072x128xf32>, vector<16x128xf32> -> vector<16x128xf32>
    %c0_4 = arith.constant 0 : index
    %c0_5 = arith.constant 0 : index
    %6 = vector.load %arg4[%c0_4, %c0_5] : memref<1x128xf32, #tpu.memory_space<vmem>>, vector<1x128xf32>
    %7 = vector.broadcast %6 : vector<1x128xf32> to vector<16x128xf32>
    %8 = arith.addf %5, %7 : vector<16x128xf32>
    %cst_6 = arith.constant dense<0.000000e+00> : vector<128xf32>
    %9 = vector.multi_reduction <add>, %8, %cst_6 [0] : vector<16x128xf32> to vector<128xf32>
    %10 = vector.shape_cast %9 : vector<128xf32> to vector<1x128xf32>
    %cst_7 = arith.constant 1.600000e+01 : f32
    %11 = vector.broadcast %cst_7 : f32 to vector<1x128xf32>
    %12 = arith.divf %10, %11 : vector<1x128xf32>
    %13 = vector.broadcast %12 : vector<1x128xf32> to vector<16x128xf32>
    %14 = arith.subf %8, %13 : vector<16x128xf32>
    %15 = arith.mulf %14, %14 : vector<16x128xf32>
    %cst_8 = arith.constant dense<0.000000e+00> : vector<128xf32>
    %16 = vector.multi_reduction <add>, %15, %cst_8 [0] : vector<16x128xf32> to vector<128xf32>
    %17 = vector.shape_cast %16 : vector<128xf32> to vector<1x128xf32>
    %cst_9 = arith.constant 1.500000e+01 : f32
    %18 = vector.broadcast %cst_9 : f32 to vector<1x128xf32>
    %19 = arith.divf %17, %18 : vector<1x128xf32>
    %cst_10 = arith.constant 9.99999974E-6 : f32
    %20 = vector.broadcast %cst_10 : f32 to vector<1x128xf32>
    %21 = arith.addf %19, %20 : vector<1x128xf32>
    %22 = math.rsqrt %21 : vector<1x128xf32>
    %c0_11 = arith.constant 0 : index
    %c0_12 = arith.constant 0 : index
    %23 = vector.load %arg5[%c0_11, %c0_12] : memref<1x128xf32, #tpu.memory_space<vmem>>, vector<1x128xf32>
    %24 = vector.broadcast %22 : vector<1x128xf32> to vector<16x128xf32>
    %25 = arith.mulf %14, %24 : vector<16x128xf32>
    %26 = vector.broadcast %23 : vector<1x128xf32> to vector<16x128xf32>
    %27 = arith.mulf %26, %25 : vector<16x128xf32>
    %c0_13 = arith.constant 0 : index
    %c0_14 = arith.constant 0 : index
    %28 = vector.load %arg6[%c0_13, %c0_14] : memref<1x128xf32, #tpu.memory_space<vmem>>, vector<1x128xf32>
    %29 = vector.broadcast %28 : vector<1x128xf32> to vector<16x128xf32>
    %30 = arith.addf %27, %29 : vector<16x128xf32>
    %cst_15 = arith.constant 0.000000e+00 : f32
    %31 = vector.broadcast %cst_15 : f32 to vector<16x128xf32>
    %32 = arith.maximumf %30, %31 : vector<16x128xf32>
    %33 = tpu.iota {dimensions = array<i32: 0>} : vector<16x128xi32>
    %34 = tpu.iota {dimensions = array<i32: 1>} : vector<16x128xi32>
    %c256_i32 = arith.constant 256 : i32
    %35 = vector.broadcast %c256_i32 : i32 to vector<16x128xi32>
    %36 = arith.muli %33, %35 : vector<16x128xi32>
    %c128_i32 = arith.constant 128 : i32
    %37 = arith.muli %arg0, %c128_i32 : i32
    %38 = vector.broadcast %37 : i32 to vector<16x128xi32>
    %39 = arith.addi %38, %34 : vector<16x128xi32>
    %40 = arith.addi %36, %39 : vector<16x128xi32>
    %c0_16 = arith.constant 0 : index
    %41 = memref.load %arg1[%c0_16] : memref<1xi32, #tpu.memory_space<smem>>
    %c-1640531527_i32 = arith.constant -1640531527 : i32
    %42 = arith.muli %41, %c-1640531527_i32 : i32
    %43 = vector.broadcast %42 : i32 to vector<16x128xi32>
    %44 = arith.xori %40, %43 : vector<16x128xi32>
    %c16_i32 = arith.constant 16 : i32
    %45 = vector.broadcast %c16_i32 : i32 to vector<16x128xi32>
    %46 = arith.shrui %44, %45 : vector<16x128xi32>
    %47 = arith.xori %44, %46 : vector<16x128xi32>
    %c-2048144789_i32 = arith.constant -2048144789 : i32
    %48 = vector.broadcast %c-2048144789_i32 : i32 to vector<16x128xi32>
    %49 = arith.muli %47, %48 : vector<16x128xi32>
    %c13_i32 = arith.constant 13 : i32
    %50 = vector.broadcast %c13_i32 : i32 to vector<16x128xi32>
    %51 = arith.shrui %49, %50 : vector<16x128xi32>
    %52 = arith.xori %49, %51 : vector<16x128xi32>
    %c-1028477387_i32 = arith.constant -1028477387 : i32
    %53 = vector.broadcast %c-1028477387_i32 : i32 to vector<16x128xi32>
    %54 = arith.muli %52, %53 : vector<16x128xi32>
    %c16_i32_17 = arith.constant 16 : i32
    %55 = vector.broadcast %c16_i32_17 : i32 to vector<16x128xi32>
    %56 = arith.shrui %54, %55 : vector<16x128xi32>
    %57 = arith.xori %54, %56 : vector<16x128xi32>
    %c8_i32 = arith.constant 8 : i32
    %58 = vector.broadcast %c8_i32 : i32 to vector<16x128xi32>
    %59 = arith.shrui %57, %58 : vector<16x128xi32>
    %c8388608_i32 = arith.constant 8388608 : i32
    %60 = vector.broadcast %c8388608_i32 : i32 to vector<16x128xi32>
    %61 = arith.cmpi ult, %59, %60 : vector<16x128xi32>
    %cst_18 = arith.constant 2.000000e+00 : f32
    %62 = vector.broadcast %cst_18 : f32 to vector<16x128xf32>
    %63 = arith.mulf %32, %62 : vector<16x128xf32>
    %cst_19 = arith.constant 0.000000e+00 : f32
    %64 = vector.broadcast %cst_19 : f32 to vector<16x128xf32>
    %65 = arith.select %61, %63, %64 : vector<16x128xi1>, vector<16x128xf32>
    %c0_20 = arith.constant 0 : index
    %c0_21 = arith.constant 0 : index
    %66 = vector.load %arg10[%c0_20, %c0_21] : memref<16x128xf32, #tpu.memory_space<vmem>>, vector<16x128xf32>
    %c0_22 = arith.constant 0 : index
    %c0_23 = arith.constant 0 : index
    %67 = vector.load %arg7[%c0_22, %c0_23] : memref<128x128xf32, #tpu.memory_space<vmem>>, vector<128x128xf32>
    %cst_24 = arith.constant dense<0.000000e+00> : vector<16x128xf32>
    %68 = tpu.matmul %65, %67, %cst_24 {dimension_numbers = #tpu.dot_dimension_numbers<[1], [0], [0], [1], [0, 0, 1, 1], [], []>} : vector<16x128xf32>, vector<128x128xf32>, vector<16x128xf32> -> vector<16x128xf32>
    %69 = arith.addf %66, %68 : vector<16x128xf32>
    %c0_25 = arith.constant 0 : index
    %c0_26 = arith.constant 0 : index
    %70 = vector.load %arg10[%c0_25, %c0_26] : memref<16x128xf32, #tpu.memory_space<vmem>>, vector<16x128xf32>
    tpu.vector_store %arg10[%c0_25, %c0_26], %69 {strides = array<i32>} : memref<16x128xf32, #tpu.memory_space<vmem>>, vector<16x128xf32>,
    %c1_i32 = arith.constant 1 : i32
    %71 = arith.cmpi eq, %arg0, %c1_i32 : i32
    %72 = arith.extui %71 : i1 to i32
    %c0_i32_27 = arith.constant 0 : i32
    %73 = arith.cmpi ne, %72, %c0_i32_27 : i32
    scf.if %73 {
      %c0_28 = arith.constant 0 : index
      %c0_29 = arith.constant 0 : index
      %74 = vector.load %arg10[%c0_28, %c0_29] : memref<16x128xf32, #tpu.memory_space<vmem>>, vector<16x128xf32>
      %c0_30 = arith.constant 0 : index
      %c0_31 = arith.constant 0 : index
      %75 = vector.load %arg8[%c0_30, %c0_31] : memref<1x128xf32, #tpu.memory_space<vmem>>, vector<1x128xf32>
      %76 = vector.broadcast %75 : vector<1x128xf32> to vector<16x128xf32>
      %77 = arith.addf %74, %76 : vector<16x128xf32>
      %c0_32 = arith.constant 0 : index
      %c0_33 = arith.constant 0 : index
      %78 = vector.load %arg9[%c0_32, %c0_33] : memref<16x128xf32, #tpu.memory_space<vmem>>, vector<16x128xf32>
      tpu.vector_store %arg9[%c0_32, %c0_33], %77 {strides = array<i32>} : memref<16x128xf32, #tpu.memory_space<vmem>>, vector<16x128xf32>,
    } else {
    }
    return
  }
  func.func @transform_0(%arg0: i32, %arg1: memref<1xi32, #tpu.memory_space<smem>>) -> (i32, i32) {
    %c0_i32 = arith.constant 0 : i32
    %c0_i32_0 = arith.constant 0 : i32
    %c0_i32_1 = arith.constant 0 : i32
    return %c0_i32, %c0_i32_0 : i32, i32
  }
  func.func @transform_1(%arg0: i32, %arg1: memref<1xi32, #tpu.memory_space<smem>>) -> (i32, i32) {
    %c0_i32 = arith.constant 0 : i32
    %c0_i32_0 = arith.constant 0 : i32
    return %c0_i32, %arg0 : i32, i32
  }
  func.func @transform_2(%arg0: i32, %arg1: memref<1xi32, #tpu.memory_space<smem>>) -> (i32, i32) {
    %c0_i32 = arith.constant 0 : i32
    %c0_i32_0 = arith.constant 0 : i32
    return %c0_i32, %arg0 : i32, i32
  }
  func.func @transform_3(%arg0: i32, %arg1: memref<1xi32, #tpu.memory_space<smem>>) -> (i32, i32) {
    %c0_i32 = arith.constant 0 : i32
    %c0_i32_0 = arith.constant 0 : i32
    return %c0_i32, %arg0 : i32, i32
  }
  func.func @transform_4(%arg0: i32, %arg1: memref<1xi32, #tpu.memory_space<smem>>) -> (i32, i32) {
    %c0_i32 = arith.constant 0 : i32
    %c0_i32_0 = arith.constant 0 : i32
    return %c0_i32, %arg0 : i32, i32
  }
  func.func @transform_5(%arg0: i32, %arg1: memref<1xi32, #tpu.memory_space<smem>>) -> (i32, i32) {
    %c0_i32 = arith.constant 0 : i32
    %c0_i32_0 = arith.constant 0 : i32
    return %arg0, %c0_i32 : i32, i32
  }
  func.func @transform_6(%arg0: i32, %arg1: memref<1xi32, #tpu.memory_space<smem>>) -> (i32, i32) {
    %c0_i32 = arith.constant 0 : i32
    %c0_i32_0 = arith.constant 0 : i32
    %c0_i32_1 = arith.constant 0 : i32
    return %c0_i32, %c0_i32_0 : i32, i32
  }
  func.func @transform_7(%arg0: i32, %arg1: memref<1xi32, #tpu.memory_space<smem>>) -> (i32, i32) {
    %c0_i32 = arith.constant 0 : i32
    %c0_i32_0 = arith.constant 0 : i32
    %c0_i32_1 = arith.constant 0 : i32
    return %c0_i32, %c0_i32_0 : i32, i32
  }
}

</mosaic_0001>

<llo_original>
// kernel: tpu_custom_call.1
$region0: #{tpu_custom_call.1}
  #allocation0 [shape = 'u32[]', space=smem, size = 0x4, offset = 0x4, fixed_abs, tag = 'smem constant byte address 0x4 - core index']
  #allocation1 [shape = 'u32[72,128]{1,0:T(1,128)}', space=vmem, size = 0x9000, scoped, tag = 'internal scratch']
  #allocation2 [shape = 'f32[16,128]{1,0:T(8,128)}', space=vmem, size = 0x2000, scoped, tag = 'scratch operand']
  #allocation3 [shape = 's32[1]{0}', space=sflag, size = 0x4, scoped, tag = 'scoped memory for tpu_custom_call.1']
  #allocation4 [shape = 's32[1]{0:T(128)S(6)}', space=smem, size = 0x200, scoped, tag = 'prefetched SMEM operand 0']
  %s0 = inlined_call_operand.<no memory space> [shape: s32[1], index: 0, kind: input, shape index: {}]
  %s1 = inlined_call_operand.hbm [shape: f32[16,3072], index: 1, kind: input, shape index: {}]
  %s2 = inlined_call_operand.hbm [shape: f32[3072,256], index: 2, kind: input, shape index: {}]
  %s3 = inlined_call_operand.hbm [shape: f32[1,256], index: 3, kind: input, shape index: {}]
  %s4 = inlined_call_operand.hbm [shape: f32[1,256], index: 4, kind: input, shape index: {}]
  %s5 = inlined_call_operand.hbm [shape: f32[1,256], index: 5, kind: input, shape index: {}]
  %s6 = inlined_call_operand.hbm [shape: f32[256,128], index: 6, kind: input, shape index: {}]
  %s7 = inlined_call_operand.hbm [shape: f32[1,128], index: 7, kind: input, shape index: {}]
  %s8 = inlined_call_operand.hbm [shape: f32[16,128], index: 8, kind: output, shape index: {}]
  %s9 = sld [smem:[#allocation0]]
  $region97: #{tpu_custom_call.1} parent=0
    _
  %s11 = ssub.s32 1, %s9
  %s12 = scalar_select 0, %s11, %s9
  %13 = sst [smem:[#allocation4]] %s0
  $region1: #{tpu_custom_call.1} parent=0
    #allocation5 [shape = 'u8[196608]{0}', space=vmem, size = 0x30000, scoped, tag = 'input window, operand 1, single buffered']
    #allocation6 [shape = 's32[2]{0}', space=sflag, size = 0x8, scoped, tag = 'scoped memory for tpu_custom_call.1']
    #allocation7 [shape = 's32[2]{0}', space=sflag, size = 0x8, scoped, tag = 'scoped memory for tpu_custom_call.1']
    #allocation8 [shape = 'u8[3145728]{0}', space=vmem, size = 0x300000, scoped, tag = 'input window, operand 2']
    #allocation9 [shape = 's32[2]{0}', space=sflag, size = 0x8, scoped, tag = 'scoped memory for tpu_custom_call.1']
    #allocation10 [shape = 'u8[1024]{0}', space=vmem, size = 0x400, scoped, tag = 'input window, operand 3']
    #allocation11 [shape = 'u8[1024]{0}', space=vmem, size = 0x400, scoped, tag = 'input window, operand 4']
    #allocation12 [shape = 's32[2]{0}', space=sflag, size = 0x8, scoped, tag = 'scoped memory for tpu_custom_call.1']
    #allocation13 [shape = 'u8[1024]{0}', space=vmem, size = 0x400, scoped, tag = 'input window, operand 5']
    #allocation14 [shape = 'u8[131072]{0}', space=vmem, size = 0x20000, scoped, tag = 'input window, operand 6']
    #allocation15 [shape = 's32[2]{0}', space=sflag, size = 0x8, scoped, tag = 'scoped memory for tpu_custom_call.1']
    #allocation16 [shape = 'u8[512]{0}', space=vmem, size = 0x400, scoped, tag = 'input window, operand 7, single buffered']
    #allocation17 [shape = 'u8[8192]{0}', space=vmem, size = 0x2000, scoped, tag = 'output window, operand 0, single buffered']
    %14 = vsyncpa [#allocation6], 0
    %15 = vsyncpa [#allocation9], 0
    %s16 = scalar_lea.sflag [#allocation9], 1
    %17 = vsyncpa %s16, 0
    %18 = vsyncpa [#allocation12], 0
    %s19 = scalar_lea.sflag [#allocation12], 1
    %20 = vsyncpa %s19, 0
    %21 = vsyncpa [#allocation15], 0
    %s22 = scalar_lea.sflag [#allocation15], 1
    %23 = vsyncpa %s22, 0
    %24 = vsyncpa [#allocation7], 0
    loop: start=0, step=1, limit=4
    $region2: #{tpu_custom_call.1} parent=1 // loop_pre_header
      _
    $region3: #{tpu_custom_call.1} parent=1 // loop_header
      %s26 = sphi 0, %s30
      %p27 = scmp.ge.s32.totalorder %s26, 4
      %s34 = sphi 0, %s34
      %s36 = sphi 0, %s34
      %s37 = sphi 0, %s36
      %s51 = sphi 0, %s37
      %s57 = sphi 0, %s59
      %s60 = sphi 0, %s57
      %s61 = sphi 0, %s60
      %s77 = sphi 0, %s61
      %s83 = sphi 0, %s85
      %s86 = sphi 0, %s83
      %s87 = sphi 0, %s86
      %s103 = sphi 0, %s87
      %s109 = sphi 0, %s111
      %s112 = sphi 0, %s109
      %s113 = sphi 0, %s112
      %s129 = sphi 0, %s113
      %s135 = sphi 0, %s137
      %s138 = sphi 0, %s135
      %s139 = sphi 0, %s138
      %s155 = sphi 0, %s139
      %s161 = sphi 0, %s163
      %s164 = sphi 0, %s161
      %s165 = sphi 0, %s164
      %s181 = sphi 0, %s165
      %s185 = sphi 0, %s185
      %s187 = sphi 0, %s185
      %s188 = sphi 0, %s187
      %s202 = sphi 0, %s188
      %s206 = sphi 0, %s206
      %s208 = sphi 0, %s206
      %s209 = sphi 0, %s208
      %s223 = sphi 0, %s209
    $region4: #{tpu_custom_call.1} parent=1 // loop_header_branch
      %29 = sbr.rel (%p27) target = $region8
    $region5: #{tpu_custom_call.1} parent=1 // loop_body
      %s31 = ssub.s32 %s26, 1
      %s32 = ssub.s32 %s26, 2
      %s33 = sadd.s32 %s26, 1
      %s35 = sadd.s32 %s34, 1
      %p38 = scmp.eq.s32.totalorder %s26, 1
      %p39 = scmp.ne.s32.totalorder %s34, %s36
      %p40 = scmp.eq.s32.totalorder %s26, 0
      %p41 = por %p39, %p40
      %p42 = scmp.ne.s32.totalorder %s34, %s36
      %p43 = scmp.eq.s32.totalorder %s31, 1
      %p44 = por %p42, %p43
      %p45 = scmp.ne.s32.totalorder %s36, %s37
      %p46 = scmp.eq.s32.totalorder %s31, 0
      %p47 = por %p45, %p46
      %p48 = scmp.ne.s32.totalorder %s36, %s37
      %p49 = scmp.eq.s32.totalorder %s32, 1
      %p50 = por %p48, %p49
      %p52 = scmp.ne.s32.totalorder %s37, %s51
      %p53 = scmp.eq.s32.totalorder %s32, 0
      %p54 = por %p52, %p53
      %s55 = ssub.s32 %s26, %s33
      %p56 = scmp.eq.s32.totalorder %s55, 0
      %s58 = sadd.s32 %s57, 1
      %s59 = scalar_select %p56, %s57, %s58
      %p62 = pneg %p56
      %p63 = scmp.eq.s32.totalorder %s26, 1
      %p64 = por %p62, %p63
      %p65 = scmp.ne.s32.totalorder %s57, %s60
      %p66 = scmp.eq.s32.totalorder %s26, 0
      %p67 = por %p65, %p66
      %p68 = scmp.ne.s32.totalorder %s57, %s60
      %p69 = scmp.eq.s32.totalorder %s31, 1
      %p70 = por %p68, %p69
      %p71 = scmp.ne.s32.totalorder %s60, %s61
      %p72 = scmp.eq.s32.totalorder %s31, 0
      %p73 = por %p71, %p72
      %p74 = scmp.ne.s32.totalorder %s60, %s61
      %p75 = scmp.eq.s32.totalorder %s32, 1
      %p76 = por %p74, %p75
      %p78 = scmp.ne.s32.totalorder %s61, %s77
      %p79 = scmp.eq.s32.totalorder %s32, 0
      %p80 = por %p78, %p79
      %s81 = ssub.s32 %s26, %s33
      %p82 = scmp.eq.s32.totalorder %s81, 0
      %s84 = sadd.s32 %s83, 1
      %s85 = scalar_select %p82, %s83, %s84
      %p88 = pneg %p82
      %p89 = scmp.eq.s32.totalorder %s26, 1
      %p90 = por %p88, %p89
      %p91 = scmp.ne.s32.totalorder %s83, %s86
      %p92 = scmp.eq.s32.totalorder %s26, 0
      %p93 = por %p91, %p92
      %p94 = scmp.ne.s32.totalorder %s83, %s86
      %p95 = scmp.eq.s32.totalorder %s31, 1
      %p96 = por %p94, %p95
      %p97 = scmp.ne.s32.totalorder %s86, %s87
      %p98 = scmp.eq.s32.totalorder %s31, 0
      %p99 = por %p97, %p98
      %p100 = scmp.ne.s32.totalorder %s86, %s87
      %p101 = scmp.eq.s32.totalorder %s32, 1
      %p102 = por %p100, %p101
      %p104 = scmp.ne.s32.totalorder %s87, %s103
      %p105 = scmp.eq.s32.totalorder %s32, 0
      %p106 = por %p104, %p105
      %s107 = ssub.s32 %s26, %s33
      %p108 = scmp.eq.s32.totalorder %s107, 0
      %s110 = sadd.s32 %s109, 1
      %s111 = scalar_select %p108, %s109, %s110
      %p114 = pneg %p108
      %p115 = scmp.eq.s32.totalorder %s26, 1
      %p116 = por %p114, %p115
      %p117 = scmp.ne.s32.totalorder %s109, %s112
      %p118 = scmp.eq.s32.totalorder %s26, 0
      %p119 = por %p117, %p118
      %p120 = scmp.ne.s32.totalorder %s109, %s112
      %p121 = scmp.eq.s32.totalorder %s31, 1
      %p122 = por %p120, %p121
      %p123 = scmp.ne.s32.totalorder %s112, %s113
      %p124 = scmp.eq.s32.totalorder %s31, 0
      %p125 = por %p123, %p124
      %p126 = scmp.ne.s32.totalorder %s112, %s113
      %p127 = scmp.eq.s32.totalorder %s32, 1
      %p128 = por %p126, %p127
      %p130 = scmp.ne.s32.totalorder %s113, %s129
      %p131 = scmp.eq.s32.totalorder %s32, 0
      %p132 = por %p130, %p131
      %s133 = ssub.s32 %s26, %s33
      %p134 = scmp.eq.s32.totalorder %s133, 0
      %s136 = sadd.s32 %s135, 1
      %s137 = scalar_select %p134, %s135, %s136
      %p140 = pneg %p134
      %p141 = scmp.eq.s32.totalorder %s26, 1
      %p142 = por %p140, %p141
      %p143 = scmp.ne.s32.totalorder %s135, %s138
      %p144 = scmp.eq.s32.totalorder %s26, 0
      %p145 = por %p143, %p144
      %p146 = scmp.ne.s32.totalorder %s135, %s138
      %p147 = scmp.eq.s32.totalorder %s31, 1
      %p148 = por %p146, %p147
      %p149 = scmp.ne.s32.totalorder %s138, %s139
      %p150 = scmp.eq.s32.totalorder %s31, 0
      %p151 = por %p149, %p150
      %p152 = scmp.ne.s32.totalorder %s138, %s139
      %p153 = scmp.eq.s32.totalorder %s32, 1
      %p154 = por %p152, %p153
      %p156 = scmp.ne.s32.totalorder %s139, %s155
      %p157 = scmp.eq.s32.totalorder %s32, 0
      %p158 = por %p156, %p157
      %s159 = ssub.s32 %s26, %s33
      %p160 = scmp.eq.s32.totalorder %s159, 0
      %s162 = sadd.s32 %s161, 1
      %s163 = scalar_select %p160, %s161, %s162
      %p166 = pneg %p160
      %p167 = scmp.eq.s32.totalorder %s26, 1
      %p168 = por %p166, %p167
      %p169 = scmp.ne.s32.totalorder %s161, %s164
      %p170 = scmp.eq.s32.totalorder %s26, 0
      %p171 = por %p169, %p170
      %p172 = scmp.ne.s32.totalorder %s161, %s164
      %p173 = scmp.eq.s32.totalorder %s31, 1
      %p174 = por %p172, %p173
      %p175 = scmp.ne.s32.totalorder %s164, %s165
      %p176 = scmp.eq.s32.totalorder %s31, 0
      %p177 = por %p175, %p176
      %p178 = scmp.ne.s32.totalorder %s164, %s165
      %p179 = scmp.eq.s32.totalorder %s32, 1
      %p180 = por %p178, %p179
      %p182 = scmp.ne.s32.totalorder %s165, %s181
      %p183 = scmp.eq.s32.totalorder %s32, 0
      %p184 = por %p182, %p183
      %s186 = sadd.s32 %s185, 1
      %p189 = scmp.eq.s32.totalorder %s26, 1
      %p190 = scmp.ne.s32.totalorder %s185, %s187
      %p191 = scmp.eq.s32.totalorder %s26, 0
      %p192 = por %p190, %p191
      %p193 = scmp.ne.s32.totalorder %s185, %s187
      %p194 = scmp.eq.s32.totalorder %s31, 1
      %p195 = por %p193, %p194
      %p196 = scmp.ne.s32.totalorder %s187, %s188
      %p197 = scmp.eq.s32.totalorder %s31, 0
      %p198 = por %p196, %p197
      %p199 = scmp.ne.s32.totalorder %s187, %s188
      %p200 = scmp.eq.s32.totalorder %s32, 1
      %p201 = por %p199, %p200
      %p203 = scmp.ne.s32.totalorder %s188, %s202
      %p204 = scmp.eq.s32.totalorder %s32, 0
      %p205 = por %p203, %p204
      %s207 = sadd.s32 %s206, 1
      %p210 = scmp.eq.s32.totalorder %s26, 1
      %p211 = scmp.ne.s32.totalorder %s206, %s208
      %p212 = scmp.eq.s32.totalorder %s26, 0
      %p213 = por %p211, %p212
      %p214 = scmp.ne.s32.totalorder %s206, %s208
      %p215 = scmp.eq.s32.totalorder %s31, 1
      %p216 = por %p214, %p215
      %p217 = scmp.ne.s32.totalorder %s208, %s209
      %p218 = scmp.eq.s32.totalorder %s31, 0
      %p219 = por %p217, %p218
      %p220 = scmp.ne.s32.totalorder %s208, %s209
      %p221 = scmp.eq.s32.totalorder %s32, 1
      %p222 = por %p220, %p221
      %p224 = scmp.ne.s32.totalorder %s209, %s223
      %p225 = scmp.eq.s32.totalorder %s32, 0
      %p226 = por %p224, %p225
      %p227 = scmp.le.s32.totalorder 1, %s26
      %p228 = scmp.lt.s32.totalorder %s26, 3
      %p229 = pnand %p227, %p228
      %p230 = pneg %p229
      // Predicated region
      $region9: #{tpu_custom_call.1} parent=5 // pred_check
        _
      $region10: #{tpu_custom_call.1} parent=5 // pred_check_branch
        %232 = sbr.rel (%p229) target = $region12
      $region11: #{tpu_custom_call.1} parent=5 // pred_region
        %s233 = ssub.s32 %s26, 1
        // Predicated region
        $region13: #{tpu_custom_call.1} parent=11 // pred_check
          %p234 = pneg %p47
        $region14: #{tpu_custom_call.1} parent=11 // pred_check_branch
          %236 = sbr.rel (%p234) target = $region16
        $region15: #{tpu_custom_call.1} parent=11 // pred_region
          %238 = vsyncadd [#allocation6], 0
          %s239 = sshll.u32 %s1, 4
          %s240 = int_to_ptr.hbm [resolvable:$true] %s239
          %s241 = sshll.u32 [#allocation5], 4
          %s242 = int_to_ptr.vmem [resolvable:$true] %s241
          %247 = dma.hbm_to_vmem [thread:$0]  %s240, 6144, %s242, [#allocation6], 3072, 3072, 192
        $region16: #{tpu_custom_call.1} parent=11 // pred_fallthru
          _
        // Predicated region
        $region17: #{tpu_custom_call.1} parent=11 // pred_check
          %p248 = pneg %p198
        $region18: #{tpu_custom_call.1} parent=11 // pred_check_branch
          %250 = sbr.rel (%p248) target = $region20
        $region19: #{tpu_custom_call.1} parent=11 // pred_region
          %252 = vsyncadd [#allocation15], 0
          %s254 = sshll.u32 %s7, 4
          %s255 = int_to_ptr.hbm [resolvable:$true] %s254
          %s256 = sshll.u32 [#allocation16], 4
          %s257 = int_to_ptr.vmem [resolvable:$true] %s256
          %259 = dma.hbm_to_vmem [thread:$0]  %s255, 16, %s257, [#allocation15]
        $region20: #{tpu_custom_call.1} parent=11 // pred_fallthru
          _
      $region12: #{tpu_custom_call.1} parent=5 // pred_fallthru
        _
      %p260 = scmp.lt.s32.totalorder %s26, 2
      // Predicated region
      $region21: #{tpu_custom_call.1} parent=5 // pred_check
        %p261 = pneg %p260
      $region22: #{tpu_custom_call.1} parent=5 // pred_check_branch
        %263 = sbr.rel (%p261) target = $region24
      $region23: #{tpu_custom_call.1} parent=5 // pred_region
        // Predicated region
        $region25: #{tpu_custom_call.1} parent=23 // pred_check
          %p264 = pneg %p67
        $region26: #{tpu_custom_call.1} parent=23 // pred_check_branch
          %266 = sbr.rel (%p264) target = $region28
        $region27: #{tpu_custom_call.1} parent=23 // pred_region
          %s267 = sand.u32 %s26, 1
          %s268 = scalar_lea.sflag [#allocation9], %s267
          %s269 = sand.u32 %s57, 1
          %s270 = smul.addr %s269, 3072
          %s271 = scalar_lea.vmem [#allocation8], %s270
          %273 = vsyncadd %s268, 0
          %s274 = smul.addr %s26, 8
          %s275 = scalar_lea.hbm %s2, %s274
          %s276 = sshll.u32 %s275, 4
          %s277 = int_to_ptr.hbm [resolvable:$true] %s276
          %s278 = sshll.u32 %s271, 4
          %s279 = int_to_ptr.vmem [resolvable:$true] %s278
          %284 = dma.hbm_to_vmem [thread:$0]  %s277, 49152, %s279, %s268, 256, 128, 8
        $region28: #{tpu_custom_call.1} parent=23 // pred_fallthru
          _
        // Predicated region
        $region29: #{tpu_custom_call.1} parent=23 // pred_check
          %p285 = pneg %p93
        $region30: #{tpu_custom_call.1} parent=23 // pred_check_branch
          %287 = sbr.rel (%p285) target = $region32
        $region31: #{tpu_custom_call.1} parent=23 // pred_region
          %s288 = sand.u32 %s26, 1
          %s289 = scalar_lea.sflag [#allocation9], %s288
          %s290 = sand.u32 %s83, 1
          %s291 = scalar_lea.vmem [#allocation10], %s290
          %293 = vsyncadd %s289, 0
          %s294 = scalar_lea.hbm %s3, %s26
          %s296 = sshll.u32 %s294, 4
          %s297 = int_to_ptr.hbm [resolvable:$true] %s296
          %s298 = sshll.u32 %s291, 4
          %s299 = int_to_ptr.vmem [resolvable:$true] %s298
          %301 = dma.hbm_to_vmem [thread:$0]  %s297, 16, %s299, %s289
        $region32: #{tpu_custom_call.1} parent=23 // pred_fallthru
          _
        // Predicated region
        $region33: #{tpu_custom_call.1} parent=23 // pred_check
          %p302 = pneg %p119
        $region34: #{tpu_custom_call.1} parent=23 // pred_check_branch
          %304 = sbr.rel (%p302) target = $region36
        $region35: #{tpu_custom_call.1} parent=23 // pred_region
          %s305 = sand.u32 %s26, 1
          %s306 = scalar_lea.sflag [#allocation12], %s305
          %s307 = sand.u32 %s109, 1
          %s308 = scalar_lea.vmem [#allocation11], %s307
          %310 = vsyncadd %s306, 0
          %s311 = scalar_lea.hbm %s4, %s26
          %s313 = sshll.u32 %s311, 4
          %s314 = int_to_ptr.hbm [resolvable:$true] %s313
          %s315 = sshll.u32 %s308, 4
          %s316 = int_to_ptr.vmem [resolvable:$true] %s315
          %318 = dma.hbm_to_vmem [thread:$0]  %s314, 16, %s316, %s306
        $region36: #{tpu_custom_call.1} parent=23 // pred_fallthru
          _
        // Predicated region
        $region37: #{tpu_custom_call.1} parent=23 // pred_check
          %p319 = pneg %p145
        $region38: #{tpu_custom_call.1} parent=23 // pred_check_branch
          %321 = sbr.rel (%p319) target = $region40
        $region39: #{tpu_custom_call.1} parent=23 // pred_region
          %s322 = sand.u32 %s26, 1
          %s323 = scalar_lea.sflag [#allocation12], %s322
          %s324 = sand.u32 %s135, 1
          %s325 = scalar_lea.vmem [#allocation13], %s324
          %327 = vsyncadd %s323, 0
          %s328 = scalar_lea.hbm %s5, %s26
          %s330 = sshll.u32 %s328, 4
          %s331 = int_to_ptr.hbm [resolvable:$true] %s330
          %s332 = sshll.u32 %s325, 4
          %s333 = int_to_ptr.vmem [resolvable:$true] %s332
          %335 = dma.hbm_to_vmem [thread:$0]  %s331, 16, %s333, %s323
        $region40: #{tpu_custom_call.1} parent=23 // pred_fallthru
          _
        // Predicated region
        $region41: #{tpu_custom_call.1} parent=23 // pred_check
          %p336 = pneg %p171
        $region42: #{tpu_custom_call.1} parent=23 // pred_check_branch
          %338 = sbr.rel (%p336) target = $region44
        $region43: #{tpu_custom_call.1} parent=23 // pred_region
          %s339 = sand.u32 %s26, 1
          %s340 = scalar_lea.sflag [#allocation15], %s339
          %s341 = sand.u32 %s161, 1
          %s342 = smul.addr %s341, 128
          %s343 = scalar_lea.vmem [#allocation14], %s342
          %s344 = smul.u32 16, %s26
          %346 = vsyncadd %s340, 0
          %s347 = smul.addr %s344, 8
          %s348 = scalar_lea.hbm %s6, %s347
          %s349 = sshll.u32 %s348, 4
          %s350 = int_to_ptr.hbm [resolvable:$true] %s349
          %s351 = sshll.u32 %s343, 4
          %s352 = int_to_ptr.vmem [resolvable:$true] %s351
          %357 = dma.hbm_to_vmem [thread:$0]  %s350, 2048, %s352, %s340, 128, 128, 8
        $region44: #{tpu_custom_call.1} parent=23 // pred_fallthru
          _
      $region24: #{tpu_custom_call.1} parent=5 // pred_fallthru
        _
      %p358 = scmp.le.s32.totalorder 1, %s26
      %p359 = scmp.lt.s32.totalorder %s26, 3
      %p360 = pnand %p358, %p359
      %p361 = pneg %p360
      // Predicated region
      $region45: #{tpu_custom_call.1} parent=5 // pred_check
        _
      $region46: #{tpu_custom_call.1} parent=5 // pred_check_branch
        %363 = sbr.rel (%p360) target = $region48
      $region47: #{tpu_custom_call.1} parent=5 // pred_region
        %s364 = ssub.s32 %s26, 1
        // Predicated region
        $region49: #{tpu_custom_call.1} parent=47 // pred_check
          %p365 = pneg %p47
        $region50: #{tpu_custom_call.1} parent=47 // pred_check_branch
          %367 = sbr.rel (%p365) target = $region52
        $region51: #{tpu_custom_call.1} parent=47 // pred_region
          %369 = dma.done [#allocation6], 6144
        $region52: #{tpu_custom_call.1} parent=47 // pred_fallthru
          _
        %s370 = sand.u32 %s31, 1
        %s371 = scalar_lea.sflag [#allocation9], %s370
        %s372 = sand.u32 %s60, 1
        %s373 = smul.addr %s372, 3072
        %s374 = scalar_lea.vmem [#allocation8], %s373
        // Predicated region
        $region53: #{tpu_custom_call.1} parent=47 // pred_check
          %p375 = pneg %p73
        $region54: #{tpu_custom_call.1} parent=47 // pred_check_branch
          %377 = sbr.rel (%p375) target = $region56
        $region55: #{tpu_custom_call.1} parent=47 // pred_region
          %379 = dma.done %s371, 49152
        $region56: #{tpu_custom_call.1} parent=47 // pred_fallthru
          _
        %s380 = sand.u32 %s31, 1
        %s381 = scalar_lea.sflag [#allocation9], %s380
        %s382 = sand.u32 %s86, 1
        %s383 = scalar_lea.vmem [#allocation10], %s382
        // Predicated region
        $region57: #{tpu_custom_call.1} parent=47 // pred_check
          %p384 = pneg %p99
        $region58: #{tpu_custom_call.1} parent=47 // pred_check_branch
          %386 = sbr.rel (%p384) target = $region60
        $region59: #{tpu_custom_call.1} parent=47 // pred_region
          %388 = dma.done %s381, 16
        $region60: #{tpu_custom_call.1} parent=47 // pred_fallthru
          _
        %s389 = sand.u32 %s31, 1
        %s390 = scalar_lea.sflag [#allocation12], %s389
        %s391 = sand.u32 %s112, 1
        %s392 = scalar_lea.vmem [#allocation11], %s391
        // Predicated region
        $region61: #{tpu_custom_call.1} parent=47 // pred_check
          %p393 = pneg %p125
        $region62: #{tpu_custom_call.1} parent=47 // pred_check_branch
          %395 = sbr.rel (%p393) target = $region64
        $region63: #{tpu_custom_call.1} parent=47 // pred_region
          %397 = dma.done %s390, 16
        $region64: #{tpu_custom_call.1} parent=47 // pred_fallthru
          _
        %s398 = sand.u32 %s31, 1
        %s399 = scalar_lea.sflag [#allocation12], %s398
        %s400 = sand.u32 %s138, 1
        %s401 = scalar_lea.vmem [#allocation13], %s400
        // Predicated region
        $region65: #{tpu_custom_call.1} parent=47 // pred_check
          %p402 = pneg %p151
        $region66: #{tpu_custom_call.1} parent=47 // pred_check_branch
          %404 = sbr.rel (%p402) target = $region68
        $region67: #{tpu_custom_call.1} parent=47 // pred_region
          %406 = dma.done %s399, 16
        $region68: #{tpu_custom_call.1} parent=47 // pred_fallthru
          _
        %s407 = sand.u32 %s31, 1
        %s408 = scalar_lea.sflag [#allocation15], %s407
        %s409 = sand.u32 %s164, 1
        %s410 = smul.addr %s409, 128
        %s411 = scalar_lea.vmem [#allocation14], %s410
        // Predicated region
        $region69: #{tpu_custom_call.1} parent=47 // pred_check
          %p412 = pneg %p177
        $region70: #{tpu_custom_call.1} parent=47 // pred_check_branch
          %414 = sbr.rel (%p412) target = $region72
        $region71: #{tpu_custom_call.1} parent=47 // pred_region
          %416 = dma.done %s408, 2048
        $region72: #{tpu_custom_call.1} parent=47 // pred_fallthru
          _
        // Predicated region
        $region73: #{tpu_custom_call.1} parent=47 // pred_check
          %p417 = pneg %p198
        $region74: #{tpu_custom_call.1} parent=47 // pred_check_branch
          %419 = sbr.rel (%p417) target = $region76
        $region75: #{tpu_custom_call.1} parent=47 // pred_region
          %421 = dma.done [#allocation15], 16
        $region76: #{tpu_custom_call.1} parent=47 // pred_fallthru
          _
        %p422 = pneg %p47
        %p423 = pneg %p44
        %s424 = sand.u32 %s31, 1
        %s425 = scalar_lea.sflag [#allocation9], %s424
        %s426 = sand.u32 %s60, 1
        %s427 = smul.addr %s426, 3072
        %s428 = scalar_lea.vmem [#allocation8], %s427
        %p429 = pneg %p73
        %p430 = pneg %p70
        %s431 = sand.u32 %s31, 1
        %s432 = scalar_lea.sflag [#allocation9], %s431
        %s433 = sand.u32 %s86, 1
        %s434 = scalar_lea.vmem [#allocation10], %s433
        %p435 = pneg %p99
        %p436 = pneg %p96
        %s437 = sand.u32 %s31, 1
        %s438 = scalar_lea.sflag [#allocation12], %s437
        %s439 = sand.u32 %s112, 1
        %s440 = scalar_lea.vmem [#allocation11], %s439
        %p441 = pneg %p125
        %p442 = pneg %p122
        %s443 = sand.u32 %s31, 1
        %s444 = scalar_lea.sflag [#allocation12], %s443
        %s445 = sand.u32 %s138, 1
        %s446 = scalar_lea.vmem [#allocation13], %s445
        %p447 = pneg %p151
        %p448 = pneg %p148
        %s449 = sand.u32 %s31, 1
        %s450 = scalar_lea.sflag [#allocation15], %s449
        %s451 = sand.u32 %s164, 1
        %s452 = smul.addr %s451, 128
        %s453 = scalar_lea.vmem [#allocation14], %s452
        %p454 = pneg %p177
        %p455 = pneg %p174
        %p456 = pneg %p198
        %p457 = pneg %p195
        %p458 = pneg %p219
        %p459 = pneg %p216
        %s460 = smul.u32 16, %s31
        %p461 = scmp.eq.s32.totalorder %s31, 0
        // Predicated region
        $region77: #{tpu_custom_call.1} parent=47 // pred_check
          %p462 = pneg %p461
        $region78: #{tpu_custom_call.1} parent=47 // pred_check_branch
          %464 = sbr.rel (%p462) target = $region80
        $region79: #{tpu_custom_call.1} parent=47 // pred_region
          %465 = vst [vmem:[#allocation2] sm:$0xff] 0.0
          %466 = vst [vmem:[#allocation2 + $0x8] sm:$0xff] 0.0
        $region80: #{tpu_custom_call.1} parent=47 // pred_fallthru
          _
        %v467 = vld [vmem:[#allocation5] sm:$0xff]
        %v468 = vld [vmem:[#allocation5 + $0x8] sm:$0xff]
        %v469 = vld [vmem:[#allocation5 + $0x10] sm:$0xff]
        %v470 = vld [vmem:[#allocation5 + $0x18] sm:$0xff]
        %v471 = vld [vmem:[#allocation5 + $0x20] sm:$0xff]
        %v472 = vld [vmem:[#allocation5 + $0x28] sm:$0xff]
        %v473 = vld [vmem:[#allocation5 + $0x30] sm:$0xff]
        %v474 = vld [vmem:[#allocation5 + $0x38] sm:$0xff]
        %v475 = vld [vmem:[#allocation5 + $0x40] sm:$0xff]
        %v476 = vld [vmem:[#allocation5 + $0x48] sm:$0xff]
        %v477 = vld [vmem:[#allocation5 + $0x50] sm:$0xff]
        %v478 = vld [vmem:[#allocation5 + $0x58] sm:$0xff]
        %v479 = vld [vmem:[#allocation5 + $0x60] sm:$0xff]
        %v480 = vld [vmem:[#allocation5 + $0x68] sm:$0xff]
        %v481 = vld [vmem:[#allocation5 + $0x70] sm:$0xff]
        %v482 = vld [vmem:[#allocation5 + $0x78] sm:$0xff]
        %v483 = vld [vmem:[#allocation5 + $0x80] sm:$0xff]
        %v484 = vld [vmem:[#allocation5 + $0x88] sm:$0xff]
        %v485 = vld [vmem:[#allocation5 + $0x90] sm:$0xff]
        %v486 = vld [vmem:[#allocation5 + $0x98] sm:$0xff]
        %v487 = vld [vmem:[#allocation5 + $0xa0] sm:$0xff]
        %v488 = vld [vmem:[#allocation5 + $0xa8] sm:$0xff]
        %v489 = vld [vmem:[#allocation5 + $0xb0] sm:$0xff]
        %v490 = vld [vmem:[#allocation5 + $0xb8] sm:$0xff]
        %v491 = vld [vmem:[#allocation5 + $0xc0] sm:$0xff]
        %v492 = vld [vmem:[#allocation5 + $0xc8] sm:$0xff]
        %v493 = vld [vmem:[#allocation5 + $0xd0] sm:$0xff]
        %v494 = vld [vmem:[#allocation5 + $0xd8] sm:$0xff]
        %v495 = vld [vmem:[#allocation5 + $0xe0] sm:$0xff]
        %v496 = vld [vmem:[#allocation5 + $0xe8] sm:$0xff]
        %v497 = vld [vmem:[#allocation5 + $0xf0] sm:$0xff]
        %v498 = vld [vmem:[#allocation5 + $0xf8] sm:$0xff]
        %v499 = vld [vmem:[#allocation5 + $0x100] sm:$0xff]
        %v500 = vld [vmem:[#allocation5 + $0x108] sm:$0xff]
        %v501 = vld [vmem:[#allocation5 + $0x110] sm:$0xff]
        %v502 = vld [vmem:[#allocation5 + $0x118] sm:$0xff]
        %v503 = vld [vmem:[#allocation5 + $0x120] sm:$0xff]
        %v504 = vld [vmem:[#allocation5 + $0x128] sm:$0xff]
        %v505 = vld [vmem:[#allocation5 + $0x130] sm:$0xff]
        %v506 = vld [vmem:[#allocation5 + $0x138] sm:$0xff]
        %v507 = vld [vmem:[#allocation5 + $0x140] sm:$0xff]
        %v508 = vld [vmem:[#allocation5 + $0x148] sm:$0xff]
        %v509 = vld [vmem:[#allocation5 + $0x150] sm:$0xff]
        %v510 = vld [vmem:[#allocation5 + $0x158] sm:$0xff]
        %v511 = vld [vmem:[#allocation5 + $0x160] sm:$0xff]
        %v512 = vld [vmem:[#allocation5 + $0x168] sm:$0xff]
        %v513 = vld [vmem:[#allocation5 + $0x170] sm:$0xff]
        %v514 = vld [vmem:[#allocation5 + $0x178] sm:$0xff]
        %v515 = vld [vmem:[%s374] sm:$0xff]
        %v516 = vld [vmem:[%s374 + $0x8] sm:$0xff]
        %v517 = vld [vmem:[%s374 + $0x10] sm:$0xff]
        %v518 = vld [vmem:[%s374 + $0x18] sm:$0xff]
        %v519 = vld [vmem:[%s374 + $0x20] sm:$0xff]
        %v520 = vld [vmem:[%s374 + $0x28] sm:$0xff]
        %v521 = vld [vmem:[%s374 + $0x30] sm:$0xff]
        %v522 = vld [vmem:[%s374 + $0x38] sm:$0xff]
        %v523 = vld [vmem:[%s374 + $0x40] sm:$0xff]
        %v524 = vld [vmem:[%s374 + $0x48] sm:$0xff]
        %v525 = vld [vmem:[%s374 + $0x50] sm:$0xff]
        %v526 = vld [vmem:[%s374 + $0x58] sm:$0xff]
        %v527 = vld [vmem:[%s374 + $0x60] sm:$0xff]
        %v528 = vld [vmem:[%s374 + $0x68] sm:$0xff]
        %v529 = vld [vmem:[%s374 + $0x70] sm:$0xff]
        %v530 = vld [vmem:[%s374 + $0x78] sm:$0xff]
        %v531 = vld [vmem:[%s374 + $0x80] sm:$0xff]
        %v532 = vld [vmem:[%s374 + $0x88] sm:$0xff]
        %v533 = vld [vmem:[%s374 + $0x90] sm:$0xff]
        %v534 = vld [vmem:[%s374 + $0x98] sm:$0xff]
        %v535 = vld [vmem:[%s374 + $0xa0] sm:$0xff]
        %v536 = vld [vmem:[%s374 + $0xa8] sm:$0xff]
        %v537 = vld [vmem:[%s374 + $0xb0] sm:$0xff]
        %v538 = vld [vmem:[%s374 + $0xb8] sm:$0xff]
        %v539 = vld [vmem:[%s374 + $0xc0] sm:$0xff]
        %v540 = vld [vmem:[%s374 + $0xc8] sm:$0xff]
        %v541 = vld [vmem:[%s374 + $0xd0] sm:$0xff]
        %v542 = vld [vmem:[%s374 + $0xd8] sm:$0xff]
        %v543 = vld [vmem:[%s374 + $0xe0] sm:$0xff]
        %v544 = vld [vmem:[%s374 + $0xe8] sm:$0xff]
        %v545 = vld [vmem:[%s374 + $0xf0] sm:$0xff]
        %v546 = vld [vmem:[%s374 + $0xf8] sm:$0xff]
        %v547 = vld [vmem:[%s374 + $0x100] sm:$0xff]
        %v548 = vld [vmem:[%s374 + $0x108] sm:$0xff]
        %v549 = vld [vmem:[%s374 + $0x110] sm:$0xff]
        %v550 = vld [vmem:[%s374 + $0x118] sm:$0xff]
        %v551 = vld [vmem:[%s374 + $0x120] sm:$0xff]
        %v552 = vld [vmem:[%s374 + $0x128] sm:$0xff]
        %v553 = vld [vmem:[%s374 + $0x130] sm:$0xff]
        %v554 = vld [vmem:[%s374 + $0x138] sm:$0xff]
        %v555 = vld [vmem:[%s374 + $0x140] sm:$0xff]
        %v556 = vld [vmem:[%s374 + $0x148] sm:$0xff]
        %v557 = vld [vmem:[%s374 + $0x150] sm:$0xff]
        %v558 = vld [vmem:[%s374 + $0x158] sm:$0xff]
        %v559 = vld [vmem:[%s374 + $0x160] sm:$0xff]
        %v560 = vld [vmem:[%s374 + $0x168] sm:$0xff]
        %v561 = vld [vmem:[%s374 + $0x170] sm:$0xff]
        %v562 = vld [vmem:[%s374 + $0x178] sm:$0xff]
        %v563 = vld [vmem:[%s374 + $0x180] sm:$0xff]
        %v564 = vld [vmem:[%s374 + $0x188] sm:$0xff]
        %v565 = vld [vmem:[%s374 + $0x190] sm:$0xff]
        %v566 = vld [vmem:[%s374 + $0x198] sm:$0xff]
        %v567 = vld [vmem:[%s374 + $0x1a0] sm:$0xff]
        %v568 = vld [vmem:[%s374 + $0x1a8] sm:$0xff]
        %v569 = vld [vmem:[%s374 + $0x1b0] sm:$0xff]
        %v570 = vld [vmem:[%s374 + $0x1b8] sm:$0xff]
        %v571 = vld [vmem:[%s374 + $0x1c0] sm:$0xff]
        %v572 = vld [vmem:[%s374 + $0x1c8] sm:$0xff]
        %v573 = vld [vmem:[%s374 + $0x1d0] sm:$0xff]
        %v574 = vld [vmem:[%s374 + $0x1d8] sm:$0xff]
        %v575 = vld [vmem:[%s374 + $0x1e0] sm:$0xff]
        %v576 = vld [vmem:[%s374 + $0x1e8] sm:$0xff]
        %v577 = vld [vmem:[%s374 + $0x1f0] sm:$0xff]
        %v578 = vld [vmem:[%s374 + $0x1f8] sm:$0xff]
        %v579 = vld [vmem:[%s374 + $0x200] sm:$0xff]
        %v580 = vld [vmem:[%s374 + $0x208] sm:$0xff]
        %v581 = vld [vmem:[%s374 + $0x210] sm:$0xff]
        %v582 = vld [vmem:[%s374 + $0x218] sm:$0xff]
        %v583 = vld [vmem:[%s374 + $0x220] sm:$0xff]
        %v584 = vld [vmem:[%s374 + $0x228] sm:$0xff]
        %v585 = vld [vmem:[%s374 + $0x230] sm:$0xff]
        %v586 = vld [vmem:[%s374 + $0x238] sm:$0xff]
        %v587 = vld [vmem:[%s374 + $0x240] sm:$0xff]
        %v588 = vld [vmem:[%s374 + $0x248] sm:$0xff]
        %v589 = vld [vmem:[%s374 + $0x250] sm:$0xff]
        %v590 = vld [vmem:[%s374 + $0x258] sm:$0xff]
        %v591 = vld [vmem:[%s374 + $0x260] sm:$0xff]
        %v592 = vld [vmem:[%s374 + $0x268] sm:$0xff]
        %v593 = vld [vmem:[%s374 + $0x270] sm:$0xff]
        %v594 = vld [vmem:[%s374 + $0x278] sm:$0xff]
        %v595 = vld [vmem:[%s374 + $0x280] sm:$0xff]
        %v596 = vld [vmem:[%s374 + $0x288] sm:$0xff]
        %v597 = vld [vmem:[%s374 + $0x290] sm:$0xff]
        %v598 = vld [vmem:[%s374 + $0x298] sm:$0xff]
        %v599 = vld [vmem:[%s374 + $0x2a0] sm:$0xff]
        %v600 = vld [vmem:[%s374 + $0x2a8] sm:$0xff]
        %v601 = vld [vmem:[%s374 + $0x2b0] sm:$0xff]
        %v602 = vld [vmem:[%s374 + $0x2b8] sm:$0xff]
        %v603 = vld [vmem:[%s374 + $0x2c0] sm:$0xff]
        %v604 = vld [vmem:[%s374 + $0x2c8] sm:$0xff]
        %v605 = vld [vmem:[%s374 + $0x2d0] sm:$0xff]
        %v606 = vld [vmem:[%s374 + $0x2d8] sm:$0xff]
        %v607 = vld [vmem:[%s374 + $0x2e0] sm:$0xff]
        %v608 = vld [vmem:[%s374 + $0x2e8] sm:$0xff]
        %v609 = vld [vmem:[%s374 + $0x2f0] sm:$0xff]
        %v610 = vld [vmem:[%s374 + $0x2f8] sm:$0xff]
        %v611 = vld [vmem:[%s374 + $0x300] sm:$0xff]
        %v612 = vld [vmem:[%s374 + $0x308] sm:$0xff]
        %v613 = vld [vmem:[%s374 + $0x310] sm:$0xff]
        %v614 = vld [vmem:[%s374 + $0x318] sm:$0xff]
        %v615 = vld [vmem:[%s374 + $0x320] sm:$0xff]
        %v616 = vld [vmem:[%s374 + $0x328] sm:$0xff]
        %v617 = vld [vmem:[%s374 + $0x330] sm:$0xff]
        %v618 = vld [vmem:[%s374 + $0x338] sm:$0xff]
        %v619 = vld [vmem:[%s374 + $0x340] sm:$0xff]
        %v620 = vld [vmem:[%s374 + $0x348] sm:$0xff]
        %v621 = vld [vmem:[%s374 + $0x350] sm:$0xff]
        %v622 = vld [vmem:[%s374 + $0x358] sm:$0xff]
        %v623 = vld [vmem:[%s374 + $0x360] sm:$0xff]
        %v624 = vld [vmem:[%s374 + $0x368] sm:$0xff]
        %v625 = vld [vmem:[%s374 + $0x370] sm:$0xff]
        %v626 = vld [vmem:[%s374 + $0x378] sm:$0xff]
        %v627 = vld [vmem:[%s374 + $0x380] sm:$0xff]
        %v628 = vld [vmem:[%s374 + $0x388] sm:$0xff]
        %v629 = vld [vmem:[%s374 + $0x390] sm:$0xff]
        %v630 = vld [vmem:[%s374 + $0x398] sm:$0xff]
        %v631 = vld [vmem:[%s374 + $0x3a0] sm:$0xff]
        %v632 = vld [vmem:[%s374 + $0x3a8] sm:$0xff]
        %v633 = vld [vmem:[%s374 + $0x3b0] sm:$0xff]
        %v634 = vld [vmem:[%s374 + $0x3b8] sm:$0xff]
        %v635 = vld [vmem:[%s374 + $0x3c0] sm:$0xff]
        %v636 = vld [vmem:[%s374 + $0x3c8] sm:$0xff]
        %v637 = vld [vmem:[%s374 + $0x3d0] sm:$0xff]
        %v638 = vld [vmem:[%s374 + $0x3d8] sm:$0xff]
        %v639 = vld [vmem:[%s374 + $0x3e0] sm:$0xff]
        %v640 = vld [vmem:[%s374 + $0x3e8] sm:$0xff]
        %v641 = vld [vmem:[%s374 + $0x3f0] sm:$0xff]
        %v642 = vld [vmem:[%s374 + $0x3f8] sm:$0xff]
        %v643 = vld [vmem:[%s374 + $0x400] sm:$0xff]
        %v644 = vld [vmem:[%s374 + $0x408] sm:$0xff]
        %v645 = vld [vmem:[%s374 + $0x410] sm:$0xff]
        %v646 = vld [vmem:[%s374 + $0x418] sm:$0xff]
        %v647 = vld [vmem:[%s374 + $0x420] sm:$0xff]
        %v648 = vld [vmem:[%s374 + $0x428] sm:$0xff]
        %v649 = vld [vmem:[%s374 + $0x430] sm:$0xff]
        %v650 = vld [vmem:[%s374 + $0x438] sm:$0xff]
        %v651 = vld [vmem:[%s374 + $0x440] sm:$0xff]
        %v652 = vld [vmem:[%s374 + $0x448] sm:$0xff]
        %v653 = vld [vmem:[%s374 + $0x450] sm:$0xff]
        %v654 = vld [vmem:[%s374 + $0x458] sm:$0xff]
        %v655 = vld [vmem:[%s374 + $0x460] sm:$0xff]
        %v656 = vld [vmem:[%s374 + $0x468] sm:$0xff]
        %v657 = vld [vmem:[%s374 + $0x470] sm:$0xff]
        %v658 = vld [vmem:[%s374 + $0x478] sm:$0xff]
        %v659 = vld [vmem:[%s374 + $0x480] sm:$0xff]
        %v660 = vld [vmem:[%s374 + $0x488] sm:$0xff]
        %v661 = vld [vmem:[%s374 + $0x490] sm:$0xff]
        %v662 = vld [vmem:[%s374 + $0x498] sm:$0xff]
        %v663 = vld [vmem:[%s374 + $0x4a0] sm:$0xff]
        %v664 = vld [vmem:[%s374 + $0x4a8] sm:$0xff]
        %v665 = vld [vmem:[%s374 + $0x4b0] sm:$0xff]
        %v666 = vld [vmem:[%s374 + $0x4b8] sm:$0xff]
        %v667 = vld [vmem:[%s374 + $0x4c0] sm:$0xff]
        %v668 = vld [vmem:[%s374 + $0x4c8] sm:$0xff]
        %v669 = vld [vmem:[%s374 + $0x4d0] sm:$0xff]
        %v670 = vld [vmem:[%s374 + $0x4d8] sm:$0xff]
        %v671 = vld [vmem:[%s374 + $0x4e0] sm:$0xff]
        %v672 = vld [vmem:[%s374 + $0x4e8] sm:$0xff]
        %v673 = vld [vmem:[%s374 + $0x4f0] sm:$0xff]
        %v674 = vld [vmem:[%s374 + $0x4f8] sm:$0xff]
        %v675 = vld [vmem:[%s374 + $0x500] sm:$0xff]
        %v676 = vld [vmem:[%s374 + $0x508] sm:$0xff]
        %v677 = vld [vmem:[%s374 + $0x510] sm:$0xff]
        %v678 = vld [vmem:[%s374 + $0x518] sm:$0xff]
        %v679 = vld [vmem:[%s374 + $0x520] sm:$0xff]
        %v680 = vld [vmem:[%s374 + $0x528] sm:$0xff]
        %v681 = vld [vmem:[%s374 + $0x530] sm:$0xff]
        %v682 = vld [vmem:[%s374 + $0x538] sm:$0xff]
        %v683 = vld [vmem:[%s374 + $0x540] sm:$0xff]
        %v684 = vld [vmem:[%s374 + $0x548] sm:$0xff]
        %v685 = vld [vmem:[%s374 + $0x550] sm:$0xff]
        %v686 = vld [vmem:[%s374 + $0x558] sm:$0xff]
        %v687 = vld [vmem:[%s374 + $0x560] sm:$0xff]
        %v688 = vld [vmem:[%s374 + $0x568] sm:$0xff]
        %v689 = vld [vmem:[%s374 + $0x570] sm:$0xff]
        %v690 = vld [vmem:[%s374 + $0x578] sm:$0xff]
        %v691 = vld [vmem:[%s374 + $0x580] sm:$0xff]
        %v692 = vld [vmem:[%s374 + $0x588] sm:$0xff]
        %v693 = vld [vmem:[%s374 + $0x590] sm:$0xff]
        %v694 = vld [vmem:[%s374 + $0x598] sm:$0xff]
        %v695 = vld [vmem:[%s374 + $0x5a0] sm:$0xff]
        %v696 = vld [vmem:[%s374 + $0x5a8] sm:$0xff]
        %v697 = vld [vmem:[%s374 + $0x5b0] sm:$0xff]
        %v698 = vld [vmem:[%s374 + $0x5b8] sm:$0xff]
        %v699 = vld [vmem:[%s374 + $0x5c0] sm:$0xff]
        %v700 = vld [vmem:[%s374 + $0x5c8] sm:$0xff]
        %v701 = vld [vmem:[%s374 + $0x5d0] sm:$0xff]
        %v702 = vld [vmem:[%s374 + $0x5d8] sm:$0xff]
        %v703 = vld [vmem:[%s374 + $0x5e0] sm:$0xff]
        %v704 = vld [vmem:[%s374 + $0x5e8] sm:$0xff]
        %v705 = vld [vmem:[%s374 + $0x5f0] sm:$0xff]
        %v706 = vld [vmem:[%s374 + $0x5f8] sm:$0xff]
        %v707 = vld [vmem:[%s374 + $0x600] sm:$0xff]
        %v708 = vld [vmem:[%s374 + $0x608] sm:$0xff]
        %v709 = vld [vmem:[%s374 + $0x610] sm:$0xff]
        %v710 = vld [vmem:[%s374 + $0x618] sm:$0xff]
        %v711 = vld [vmem:[%s374 + $0x620] sm:$0xff]
        %v712 = vld [vmem:[%s374 + $0x628] sm:$0xff]
        %v713 = vld [vmem:[%s374 + $0x630] sm:$0xff]
        %v714 = vld [vmem:[%s374 + $0x638] sm:$0xff]
        %v715 = vld [vmem:[%s374 + $0x640] sm:$0xff]
        %v716 = vld [vmem:[%s374 + $0x648] sm:$0xff]
        %v717 = vld [vmem:[%s374 + $0x650] sm:$0xff]
        %v718 = vld [vmem:[%s374 + $0x658] sm:$0xff]
        %v719 = vld [vmem:[%s374 + $0x660] sm:$0xff]
        %v720 = vld [vmem:[%s374 + $0x668] sm:$0xff]
        %v721 = vld [vmem:[%s374 + $0x670] sm:$0xff]
        %v722 = vld [vmem:[%s374 + $0x678] sm:$0xff]
        %v723 = vld [vmem:[%s374 + $0x680] sm:$0xff]
        %v724 = vld [vmem:[%s374 + $0x688] sm:$0xff]
        %v725 = vld [vmem:[%s374 + $0x690] sm:$0xff]
        %v726 = vld [vmem:[%s374 + $0x698] sm:$0xff]
        %v727 = vld [vmem:[%s374 + $0x6a0] sm:$0xff]
        %v728 = vld [vmem:[%s374 + $0x6a8] sm:$0xff]
        %v729 = vld [vmem:[%s374 + $0x6b0] sm:$0xff]
        %v730 = vld [vmem:[%s374 + $0x6b8] sm:$0xff]
        %v731 = vld [vmem:[%s374 + $0x6c0] sm:$0xff]
        %v732 = vld [vmem:[%s374 + $0x6c8] sm:$0xff]
        %v733 = vld [vmem:[%s374 + $0x6d0] sm:$0xff]
        %v734 = vld [vmem:[%s374 + $0x6d8] sm:$0xff]
        %v735 = vld [vmem:[%s374 + $0x6e0] sm:$0xff]
        %v736 = vld [vmem:[%s374 + $0x6e8] sm:$0xff]
        %v737 = vld [vmem:[%s374 + $0x6f0] sm:$0xff]
        %v738 = vld [vmem:[%s374 + $0x6f8] sm:$0xff]
        %v739 = vld [vmem:[%s374 + $0x700] sm:$0xff]
        %v740 = vld [vmem:[%s374 + $0x708] sm:$0xff]
        %v741 = vld [vmem:[%s374 + $0x710] sm:$0xff]
        %v742 = vld [vmem:[%s374 + $0x718] sm:$0xff]
        %v743 = vld [vmem:[%s374 + $0x720] sm:$0xff]
        %v744 = vld [vmem:[%s374 + $0x728] sm:$0xff]
        %v745 = vld [vmem:[%s374 + $0x730] sm:$0xff]
        %v746 = vld [vmem:[%s374 + $0x738] sm:$0xff]
        %v747 = vld [vmem:[%s374 + $0x740] sm:$0xff]
        %v748 = vld [vmem:[%s374 + $0x748] sm:$0xff]
        %v749 = vld [vmem:[%s374 + $0x750] sm:$0xff]
        %v750 = vld [vmem:[%s374 + $0x758] sm:$0xff]
        %v751 = vld [vmem:[%s374 + $0x760] sm:$0xff]
        %v752 = vld [vmem:[%s374 + $0x768] sm:$0xff]
        %v753 = vld [vmem:[%s374 + $0x770] sm:$0xff]
        %v754 = vld [vmem:[%s374 + $0x778] sm:$0xff]
        %v755 = vld [vmem:[%s374 + $0x780] sm:$0xff]
        %v756 = vld [vmem:[%s374 + $0x788] sm:$0xff]
        %v757 = vld [vmem:[%s374 + $0x790] sm:$0xff]
        %v758 = vld [vmem:[%s374 + $0x798] sm:$0xff]
        %v759 = vld [vmem:[%s374 + $0x7a0] sm:$0xff]
        %v760 = vld [vmem:[%s374 + $0x7a8] sm:$0xff]
        %v761 = vld [vmem:[%s374 + $0x7b0] sm:$0xff]
        %v762 = vld [vmem:[%s374 + $0x7b8] sm:$0xff]
        %v763 = vld [vmem:[%s374 + $0x7c0] sm:$0xff]
        %v764 = vld [vmem:[%s374 + $0x7c8] sm:$0xff]
        %v765 = vld [vmem:[%s374 + $0x7d0] sm:$0xff]
        %v766 = vld [vmem:[%s374 + $0x7d8] sm:$0xff]
        %v767 = vld [vmem:[%s374 + $0x7e0] sm:$0xff]
        %v768 = vld [vmem:[%s374 + $0x7e8] sm:$0xff]
        %v769 = vld [vmem:[%s374 + $0x7f0] sm:$0xff]
        %v770 = vld [vmem:[%s374 + $0x7f8] sm:$0xff]
        %v771 = vld [vmem:[%s374 + $0x800] sm:$0xff]
        %v772 = vld [vmem:[%s374 + $0x808] sm:$0xff]
        %v773 = vld [vmem:[%s374 + $0x810] sm:$0xff]
        %v774 = vld [vmem:[%s374 + $0x818] sm:$0xff]
        %v775 = vld [vmem:[%s374 + $0x820] sm:$0xff]
        %v776 = vld [vmem:[%s374 + $0x828] sm:$0xff]
        %v777 = vld [vmem:[%s374 + $0x830] sm:$0xff]
        %v778 = vld [vmem:[%s374 + $0x838] sm:$0xff]
        %v779 = vld [vmem:[%s374 + $0x840] sm:$0xff]
        %v780 = vld [vmem:[%s374 + $0x848] sm:$0xff]
        %v781 = vld [vmem:[%s374 + $0x850] sm:$0xff]
        %v782 = vld [vmem:[%s374 + $0x858] sm:$0xff]
        %v783 = vld [vmem:[%s374 + $0x860] sm:$0xff]
        %v784 = vld [vmem:[%s374 + $0x868] sm:$0xff]
        %v785 = vld [vmem:[%s374 + $0x870] sm:$0xff]
        %v786 = vld [vmem:[%s374 + $0x878] sm:$0xff]
        %v787 = vld [vmem:[%s374 + $0x880] sm:$0xff]
        %v788 = vld [vmem:[%s374 + $0x888] sm:$0xff]
        %v789 = vld [vmem:[%s374 + $0x890] sm:$0xff]
        %v790 = vld [vmem:[%s374 + $0x898] sm:$0xff]
        %v791 = vld [vmem:[%s374 + $0x8a0] sm:$0xff]
        %v792 = vld [vmem:[%s374 + $0x8a8] sm:$0xff]
        %v793 = vld [vmem:[%s374 + $0x8b0] sm:$0xff]
        %v794 = vld [vmem:[%s374 + $0x8b8] sm:$0xff]
        %v795 = vld [vmem:[%s374 + $0x8c0] sm:$0xff]
        %v796 = vld [vmem:[%s374 + $0x8c8] sm:$0xff]
        %v797 = vld [vmem:[%s374 + $0x8d0] sm:$0xff]
        %v798 = vld [vmem:[%s374 + $0x8d8] sm:$0xff]
        %v799 = vld [vmem:[%s374 + $0x8e0] sm:$0xff]
        %v800 = vld [vmem:[%s374 + $0x8e8] sm:$0xff]
        %v801 = vld [vmem:[%s374 + $0x8f0] sm:$0xff]
        %v802 = vld [vmem:[%s374 + $0x8f8] sm:$0xff]
        %v803 = vld [vmem:[%s374 + $0x900] sm:$0xff]
        %v804 = vld [vmem:[%s374 + $0x908] sm:$0xff]
        %v805 = vld [vmem:[%s374 + $0x910] sm:$0xff]
        %v806 = vld [vmem:[%s374 + $0x918] sm:$0xff]
        %v807 = vld [vmem:[%s374 + $0x920] sm:$0xff]
        %v808 = vld [vmem:[%s374 + $0x928] sm:$0xff]
        %v809 = vld [vmem:[%s374 + $0x930] sm:$0xff]
        %v810 = vld [vmem:[%s374 + $0x938] sm:$0xff]
        %v811 = vld [vmem:[%s374 + $0x940] sm:$0xff]
        %v812 = vld [vmem:[%s374 + $0x948] sm:$0xff]
        %v813 = vld [vmem:[%s374 + $0x950] sm:$0xff]
        %v814 = vld [vmem:[%s374 + $0x958] sm:$0xff]
        %v815 = vld [vmem:[%s374 + $0x960] sm:$0xff]
        %v816 = vld [vmem:[%s374 + $0x968] sm:$0xff]
        %v817 = vld [vmem:[%s374 + $0x970] sm:$0xff]
        %v818 = vld [vmem:[%s374 + $0x978] sm:$0xff]
        %v819 = vld [vmem:[%s374 + $0x980] sm:$0xff]
        %v820 = vld [vmem:[%s374 + $0x988] sm:$0xff]
        %v821 = vld [vmem:[%s374 + $0x990] sm:$0xff]
        %v822 = vld [vmem:[%s374 + $0x998] sm:$0xff]
        %v823 = vld [vmem:[%s374 + $0x9a0] sm:$0xff]
        %v824 = vld [vmem:[%s374 + $0x9a8] sm:$0xff]
        %v825 = vld [vmem:[%s374 + $0x9b0] sm:$0xff]
        %v826 = vld [vmem:[%s374 + $0x9b8] sm:$0xff]
        %v827 = vld [vmem:[%s374 + $0x9c0] sm:$0xff]
        %v828 = vld [vmem:[%s374 + $0x9c8] sm:$0xff]
        %v829 = vld [vmem:[%s374 + $0x9d0] sm:$0xff]
        %v830 = vld [vmem:[%s374 + $0x9d8] sm:$0xff]
        %v831 = vld [vmem:[%s374 + $0x9e0] sm:$0xff]
        %v832 = vld [vmem:[%s374 + $0x9e8] sm:$0xff]
        %v833 = vld [vmem:[%s374 + $0x9f0] sm:$0xff]
        %v834 = vld [vmem:[%s374 + $0x9f8] sm:$0xff]
        %v835 = vld [vmem:[%s374 + $0xa00] sm:$0xff]
        %v836 = vld [vmem:[%s374 + $0xa08] sm:$0xff]
        %v837 = vld [vmem:[%s374 + $0xa10] sm:$0xff]
        %v838 = vld [vmem:[%s374 + $0xa18] sm:$0xff]
        %v839 = vld [vmem:[%s374 + $0xa20] sm:$0xff]
        %v840 = vld [vmem:[%s374 + $0xa28] sm:$0xff]
        %v841 = vld [vmem:[%s374 + $0xa30] sm:$0xff]
        %v842 = vld [vmem:[%s374 + $0xa38] sm:$0xff]
        %v843 = vld [vmem:[%s374 + $0xa40] sm:$0xff]
        %v844 = vld [vmem:[%s374 + $0xa48] sm:$0xff]
        %v845 = vld [vmem:[%s374 + $0xa50] sm:$0xff]
        %v846 = vld [vmem:[%s374 + $0xa58] sm:$0xff]
        %v847 = vld [vmem:[%s374 + $0xa60] sm:$0xff]
        %v848 = vld [vmem:[%s374 + $0xa68] sm:$0xff]
        %v849 = vld [vmem:[%s374 + $0xa70] sm:$0xff]
        %v850 = vld [vmem:[%s374 + $0xa78] sm:$0xff]
        %v851 = vld [vmem:[%s374 + $0xa80] sm:$0xff]
        %v852 = vld [vmem:[%s374 + $0xa88] sm:$0xff]
        %v853 = vld [vmem:[%s374 + $0xa90] sm:$0xff]
        %v854 = vld [vmem:[%s374 + $0xa98] sm:$0xff]
        %v855 = vld [vmem:[%s374 + $0xaa0] sm:$0xff]
        %v856 = vld [vmem:[%s374 + $0xaa8] sm:$0xff]
        %v857 = vld [vmem:[%s374 + $0xab0] sm:$0xff]
        %v858 = vld [vmem:[%s374 + $0xab8] sm:$0xff]
        %v859 = vld [vmem:[%s374 + $0xac0] sm:$0xff]
        %v860 = vld [vmem:[%s374 + $0xac8] sm:$0xff]
        %v861 = vld [vmem:[%s374 + $0xad0] sm:$0xff]
        %v862 = vld [vmem:[%s374 + $0xad8] sm:$0xff]
        %v863 = vld [vmem:[%s374 + $0xae0] sm:$0xff]
        %v864 = vld [vmem:[%s374 + $0xae8] sm:$0xff]
        %v865 = vld [vmem:[%s374 + $0xaf0] sm:$0xff]
        %v866 = vld [vmem:[%s374 + $0xaf8] sm:$0xff]
        %v867 = vld [vmem:[%s374 + $0xb00] sm:$0xff]
        %v868 = vld [vmem:[%s374 + $0xb08] sm:$0xff]
        %v869 = vld [vmem:[%s374 + $0xb10] sm:$0xff]
        %v870 = vld [vmem:[%s374 + $0xb18] sm:$0xff]
        %v871 = vld [vmem:[%s374 + $0xb20] sm:$0xff]
        %v872 = vld [vmem:[%s374 + $0xb28] sm:$0xff]
        %v873 = vld [vmem:[%s374 + $0xb30] sm:$0xff]
        %v874 = vld [vmem:[%s374 + $0xb38] sm:$0xff]
        %v875 = vld [vmem:[%s374 + $0xb40] sm:$0xff]
        %v876 = vld [vmem:[%s374 + $0xb48] sm:$0xff]
        %v877 = vld [vmem:[%s374 + $0xb50] sm:$0xff]
        %v878 = vld [vmem:[%s374 + $0xb58] sm:$0xff]
        %v879 = vld [vmem:[%s374 + $0xb60] sm:$0xff]
        %v880 = vld [vmem:[%s374 + $0xb68] sm:$0xff]
        %v881 = vld [vmem:[%s374 + $0xb70] sm:$0xff]
        %v882 = vld [vmem:[%s374 + $0xb78] sm:$0xff]
        %v883 = vld [vmem:[%s374 + $0xb80] sm:$0xff]
        %v884 = vld [vmem:[%s374 + $0xb88] sm:$0xff]
        %v885 = vld [vmem:[%s374 + $0xb90] sm:$0xff]
        %v886 = vld [vmem:[%s374 + $0xb98] sm:$0xff]
        %v887 = vld [vmem:[%s374 + $0xba0] sm:$0xff]
        %v888 = vld [vmem:[%s374 + $0xba8] sm:$0xff]
        %v889 = vld [vmem:[%s374 + $0xbb0] sm:$0xff]
        %v890 = vld [vmem:[%s374 + $0xbb8] sm:$0xff]
        %v891 = vld [vmem:[%s374 + $0xbc0] sm:$0xff]
        %v892 = vld [vmem:[%s374 + $0xbc8] sm:$0xff]
        %v893 = vld [vmem:[%s374 + $0xbd0] sm:$0xff]
        %v894 = vld [vmem:[%s374 + $0xbd8] sm:$0xff]
        %v895 = vld [vmem:[%s374 + $0xbe0] sm:$0xff]
        %v896 = vld [vmem:[%s374 + $0xbe8] sm:$0xff]
        %v897 = vld [vmem:[%s374 + $0xbf0] sm:$0xff]
        %v898 = vld [vmem:[%s374 + $0xbf8] sm:$0xff]
        %v899 = vld [vmem:[%s383] sm:$0x1]
        %v901 = vperm.slane %v899, 0
        %903 = vmatpush.msra.mxu0 %v530
        %904 = vmatpush.msra.mxu0 %v529
        %905 = vmatpush.msra.mxu0 %v528
        %906 = vmatpush.msra.mxu0 %v527
        %907 = vmatpush.msra.mxu0 %v526
        %908 = vmatpush.msra.mxu0 %v525
        %909 = vmatpush.msra.mxu0 %v524
        %910 = vmatpush.msra.mxu0 %v523
        %911 = vmatpush.msra.mxu0 %v522
        %912 = vmatpush.msra.mxu0 %v521
        %913 = vmatpush.msra.mxu0 %v520
        %914 = vmatpush.msra.mxu0 %v519
        %915 = vmatpush.msra.mxu0 %v518
        %916 = vmatpush.msra.mxu0 %v517
        %917 = vmatpush.msra.mxu0 %v516
        %918 = vmatpush.msra.mxu0 %v515
        %919 = vmatmul.f32.gmra.mxu0 %v467
        %v920 = vpop.f32.mrf.mxu0
        %v921 = vadd.f32 %v901, %v920
        %922 = vmatmul.f32.gmra.mxu0 %v491
        %v923 = vpop.f32.mrf.mxu0
        %v924 = vadd.f32 %v901, %v923
        %925 = vdwg.mxu0
        %926 = vmatpush.msra.mxu0 %v546
        %927 = vmatpush.msra.mxu0 %v545
        %928 = vmatpush.msra.mxu0 %v544
        %929 = vmatpush.msra.mxu0 %v543
        %930 = vmatpush.msra.mxu0 %v542
        %931 = vmatpush.msra.mxu0 %v541
        %932 = vmatpush.msra.mxu0 %v540
        %933 = vmatpush.msra.mxu0 %v539
        %934 = vmatpush.msra.mxu0 %v538
        %935 = vmatpush.msra.mxu0 %v537
        %936 = vmatpush.msra.mxu0 %v536
        %937 = vmatpush.msra.mxu0 %v535
        %938 = vmatpush.msra.mxu0 %v534
        %939 = vmatpush.msra.mxu0 %v533
        %940 = vmatpush.msra.mxu0 %v532
        %941 = vmatpush.msra.mxu0 %v531
        %942 = vmatmul.f32.gmra.mxu0 %v468
        %v943 = vpop.f32.mrf.mxu0
        %v944 = vadd.f32 %v921, %v943
        %945 = vmatmul.f32.gmra.mxu0 %v492
        %v946 = vpop.f32.mrf.mxu0
        %v947 = vadd.f32 %v924, %v946
        %948 = vdwg.mxu0
        %949 = vmatpush.msra.mxu0 %v562
        %950 = vmatpush.msra.mxu0 %v561
        %951 = vmatpush.msra.mxu0 %v560
        %952 = vmatpush.msra.mxu0 %v559
        %953 = vmatpush.msra.mxu0 %v558
        %954 = vmatpush.msra.mxu0 %v557
        %955 = vmatpush.msra.mxu0 %v556
        %956 = vmatpush.msra.mxu0 %v555
        %957 = vmatpush.msra.mxu0 %v554
        %958 = vmatpush.msra.mxu0 %v553
        %959 = vmatpush.msra.mxu0 %v552
        %960 = vmatpush.msra.mxu0 %v551
        %961 = vmatpush.msra.mxu0 %v550
        %962 = vmatpush.msra.mxu0 %v549
        %963 = vmatpush.msra.mxu0 %v548
        %964 = vmatpush.msra.mxu0 %v547
        %965 = vmatmul.f32.gmra.mxu0 %v469
        %v966 = vpop.f32.mrf.mxu0
        %v967 = vadd.f32 %v944, %v966
        %968 = vmatmul.f32.gmra.mxu0 %v493
        %v969 = vpop.f32.mrf.mxu0
        %v970 = vadd.f32 %v947, %v969
        %971 = vdwg.mxu0
        %972 = vmatpush.msra.mxu0 %v578
        %973 = vmatpush.msra.mxu0 %v577
        %974 = vmatpush.msra.mxu0 %v576
        %975 = vmatpush.msra.mxu0 %v575
        %976 = vmatpush.msra.mxu0 %v574
        %977 = vmatpush.msra.mxu0 %v573
        %978 = vmatpush.msra.mxu0 %v572
        %979 = vmatpush.msra.mxu0 %v571
        %980 = vmatpush.msra.mxu0 %v570
        %981 = vmatpush.msra.mxu0 %v569
        %982 = vmatpush.msra.mxu0 %v568
        %983 = vmatpush.msra.mxu0 %v567
        %984 = vmatpush.msra.mxu0 %v566
        %985 = vmatpush.msra.mxu0 %v565
        %986 = vmatpush.msra.mxu0 %v564
        %987 = vmatpush.msra.mxu0 %v563
        %988 = vmatmul.f32.gmra.mxu0 %v470
        %v989 = vpop.f32.mrf.mxu0
        %v990 = vadd.f32 %v967, %v989
        %991 = vmatmul.f32.gmra.mxu0 %v494
        %v992 = vpop.f32.mrf.mxu0
        %v993 = vadd.f32 %v970, %v992
        %994 = vdwg.mxu0
        %995 = vmatpush.msra.mxu0 %v594
        %996 = vmatpush.msra.mxu0 %v593
        %997 = vmatpush.msra.mxu0 %v592
        %998 = vmatpush.msra.mxu0 %v591
        %999 = vmatpush.msra.mxu0 %v590
        %1000 = vmatpush.msra.mxu0 %v589
        %1001 = vmatpush.msra.mxu0 %v588
        %1002 = vmatpush.msra.mxu0 %v587
        %1003 = vmatpush.msra.mxu0 %v586
        %1004 = vmatpush.msra.mxu0 %v585
        %1005 = vmatpush.msra.mxu0 %v584
        %1006 = vmatpush.msra.mxu0 %v583
        %1007 = vmatpush.msra.mxu0 %v582
        %1008 = vmatpush.msra.mxu0 %v581
        %1009 = vmatpush.msra.mxu0 %v580
        %1010 = vmatpush.msra.mxu0 %v579
        %1011 = vmatmul.f32.gmra.mxu0 %v471
        %v1012 = vpop.f32.mrf.mxu0
        %v1013 = vadd.f32 %v990, %v1012
        %1014 = vmatmul.f32.gmra.mxu0 %v495
        %v1015 = vpop.f32.mrf.mxu0
        %v1016 = vadd.f32 %v993, %v1015
        %1017 = vdwg.mxu0
        %1018 = vmatpush.msra.mxu0 %v610
        %1019 = vmatpush.msra.mxu0 %v609
        %1020 = vmatpush.msra.mxu0 %v608
        %1021 = vmatpush.msra.mxu0 %v607
        %1022 = vmatpush.msra.mxu0 %v606
        %1023 = vmatpush.msra.mxu0 %v605
        %1024 = vmatpush.msra.mxu0 %v604
        %1025 = vmatpush.msra.mxu0 %v603
        %1026 = vmatpush.msra.mxu0 %v602
        %1027 = vmatpush.msra.mxu0 %v601
        %1028 = vmatpush.msra.mxu0 %v600
        %1029 = vmatpush.msra.mxu0 %v599
        %1030 = vmatpush.msra.mxu0 %v598
        %1031 = vmatpush.msra.mxu0 %v597
        %1032 = vmatpush.msra.mxu0 %v596
        %1033 = vmatpush.msra.mxu0 %v595
        %1034 = vmatmul.f32.gmra.mxu0 %v472
        %v1035 = vpop.f32.mrf.mxu0
        %v1036 = vadd.f32 %v1013, %v1035
        %1037 = vmatmul.f32.gmra.mxu0 %v496
        %v1038 = vpop.f32.mrf.mxu0
        %v1039 = vadd.f32 %v1016, %v1038
        %1040 = vdwg.mxu0
        %1041 = vmatpush.msra.mxu0 %v626
        %1042 = vmatpush.msra.mxu0 %v625
        %1043 = vmatpush.msra.mxu0 %v624
        %1044 = vmatpush.msra.mxu0 %v623
        %1045 = vmatpush.msra.mxu0 %v622
        %1046 = vmatpush.msra.mxu0 %v621
        %1047 = vmatpush.msra.mxu0 %v620
        %1048 = vmatpush.msra.mxu0 %v619
        %1049 = vmatpush.msra.mxu0 %v618
        %1050 = vmatpush.msra.mxu0 %v617
        %1051 = vmatpush.msra.mxu0 %v616
        %1052 = vmatpush.msra.mxu0 %v615
        %1053 = vmatpush.msra.mxu0 %v614
        %1054 = vmatpush.msra.mxu0 %v613
        %1055 = vmatpush.msra.mxu0 %v612
        %1056 = vmatpush.msra.mxu0 %v611
        %1057 = vmatmul.f32.gmra.mxu0 %v473
        %v1058 = vpop.f32.mrf.mxu0
        %v1059 = vadd.f32 %v1036, %v1058
        %1060 = vmatmul.f32.gmra.mxu0 %v497
        %v1061 = vpop.f32.mrf.mxu0
        %v1062 = vadd.f32 %v1039, %v1061
        %1063 = vdwg.mxu0
        %1064 = vmatpush.msra.mxu0 %v642
        %1065 = vmatpush.msra.mxu0 %v641
        %1066 = vmatpush.msra.mxu0 %v640
        %1067 = vmatpush.msra.mxu0 %v639
        %1068 = vmatpush.msra.mxu0 %v638
        %1069 = vmatpush.msra.mxu0 %v637
        %1070 = vmatpush.msra.mxu0 %v636
        %1071 = vmatpush.msra.mxu0 %v635
        %1072 = vmatpush.msra.mxu0 %v634
        %1073 = vmatpush.msra.mxu0 %v633
        %1074 = vmatpush.msra.mxu0 %v632
        %1075 = vmatpush.msra.mxu0 %v631
        %1076 = vmatpush.msra.mxu0 %v630
        %1077 = vmatpush.msra.mxu0 %v629
        %1078 = vmatpush.msra.mxu0 %v628
        %1079 = vmatpush.msra.mxu0 %v627
        %1080 = vmatmul.f32.gmra.mxu0 %v474
        %v1081 = vpop.f32.mrf.mxu0
        %v1082 = vadd.f32 %v1059, %v1081
        %1083 = vmatmul.f32.gmra.mxu0 %v498
        %v1084 = vpop.f32.mrf.mxu0
        %v1085 = vadd.f32 %v1062, %v1084
        %1086 = vdwg.mxu0
        %1087 = vmatpush.msra.mxu0 %v658
        %1088 = vmatpush.msra.mxu0 %v657
        %1089 = vmatpush.msra.mxu0 %v656
        %1090 = vmatpush.msra.mxu0 %v655
        %1091 = vmatpush.msra.mxu0 %v654
        %1092 = vmatpush.msra.mxu0 %v653
        %1093 = vmatpush.msra.mxu0 %v652
        %1094 = vmatpush.msra.mxu0 %v651
        %1095 = vmatpush.msra.mxu0 %v650
        %1096 = vmatpush.msra.mxu0 %v649
        %1097 = vmatpush.msra.mxu0 %v648
        %1098 = vmatpush.msra.mxu0 %v647
        %1099 = vmatpush.msra.mxu0 %v646
        %1100 = vmatpush.msra.mxu0 %v645
        %1101 = vmatpush.msra.mxu0 %v644
        %1102 = vmatpush.msra.mxu0 %v643
        %1103 = vmatmul.f32.gmra.mxu0 %v475
        %v1104 = vpop.f32.mrf.mxu0
        %v1105 = vadd.f32 %v1082, %v1104
        %1106 = vmatmul.f32.gmra.mxu0 %v499
        %v1107 = vpop.f32.mrf.mxu0
        %v1108 = vadd.f32 %v1085, %v1107
        %1109 = vdwg.mxu0
        %1110 = vmatpush.msra.mxu0 %v674
        %1111 = vmatpush.msra.mxu0 %v673
        %1112 = vmatpush.msra.mxu0 %v672
        %1113 = vmatpush.msra.mxu0 %v671
        %1114 = vmatpush.msra.mxu0 %v670
        %1115 = vmatpush.msra.mxu0 %v669
        %1116 = vmatpush.msra.mxu0 %v668
        %1117 = vmatpush.msra.mxu0 %v667
        %1118 = vmatpush.msra.mxu0 %v666
        %1119 = vmatpush.msra.mxu0 %v665
        %1120 = vmatpush.msra.mxu0 %v664
        %1121 = vmatpush.msra.mxu0 %v663
        %1122 = vmatpush.msra.mxu0 %v662
        %1123 = vmatpush.msra.mxu0 %v661
        %1124 = vmatpush.msra.mxu0 %v660
        %1125 = vmatpush.msra.mxu0 %v659
        %1126 = vmatmul.f32.gmra.mxu0 %v476
        %v1127 = vpop.f32.mrf.mxu0
        %v1128 = vadd.f32 %v1105, %v1127
        %1129 = vmatmul.f32.gmra.mxu0 %v500
        %v1130 = vpop.f32.mrf.mxu0
        %v1131 = vadd.f32 %v1108, %v1130
        %1132 = vdwg.mxu0
        %1133 = vmatpush.msra.mxu0 %v690
        %1134 = vmatpush.msra.mxu0 %v689
        %1135 = vmatpush.msra.mxu0 %v688
        %1136 = vmatpush.msra.mxu0 %v687
        %1137 = vmatpush.msra.mxu0 %v686
        %1138 = vmatpush.msra.mxu0 %v685
        %1139 = vmatpush.msra.mxu0 %v684
        %1140 = vmatpush.msra.mxu0 %v683
        %1141 = vmatpush.msra.mxu0 %v682
        %1142 = vmatpush.msra.mxu0 %v681
        %1143 = vmatpush.msra.mxu0 %v680
        %1144 = vmatpush.msra.mxu0 %v679
        %1145 = vmatpush.msra.mxu0 %v678
        %1146 = vmatpush.msra.mxu0 %v677
        %1147 = vmatpush.msra.mxu0 %v676
        %1148 = vmatpush.msra.mxu0 %v675
        %1149 = vmatmul.f32.gmra.mxu0 %v477
        %v1150 = vpop.f32.mrf.mxu0
        %v1151 = vadd.f32 %v1128, %v1150
        %1152 = vmatmul.f32.gmra.mxu0 %v501
        %v1153 = vpop.f32.mrf.mxu0
        %v1154 = vadd.f32 %v1131, %v1153
        %1155 = vdwg.mxu0
        %1156 = vmatpush.msra.mxu0 %v706
        %1157 = vmatpush.msra.mxu0 %v705
        %1158 = vmatpush.msra.mxu0 %v704
        %1159 = vmatpush.msra.mxu0 %v703
        %1160 = vmatpush.msra.mxu0 %v702
        %1161 = vmatpush.msra.mxu0 %v701
        %1162 = vmatpush.msra.mxu0 %v700
        %1163 = vmatpush.msra.mxu0 %v699
        %1164 = vmatpush.msra.mxu0 %v698
        %1165 = vmatpush.msra.mxu0 %v697
        %1166 = vmatpush.msra.mxu0 %v696
        %1167 = vmatpush.msra.mxu0 %v695
        %1168 = vmatpush.msra.mxu0 %v694
        %1169 = vmatpush.msra.mxu0 %v693
        %1170 = vmatpush.msra.mxu0 %v692
        %1171 = vmatpush.msra.mxu0 %v691
        %1172 = vmatmul.f32.gmra.mxu0 %v478
        %v1173 = vpop.f32.mrf.mxu0
        %v1174 = vadd.f32 %v1151, %v1173
        %1175 = vmatmul.f32.gmra.mxu0 %v502
        %v1176 = vpop.f32.mrf.mxu0
        %v1177 = vadd.f32 %v1154, %v1176
        %1178 = vdwg.mxu0
        %1179 = vmatpush.msra.mxu0 %v722
        %1180 = vmatpush.msra.mxu0 %v721
        %1181 = vmatpush.msra.mxu0 %v720
        %1182 = vmatpush.msra.mxu0 %v719
        %1183 = vmatpush.msra.mxu0 %v718
        %1184 = vmatpush.msra.mxu0 %v717
        %1185 = vmatpush.msra.mxu0 %v716
        %1186 = vmatpush.msra.mxu0 %v715
        %1187 = vmatpush.msra.mxu0 %v714
        %1188 = vmatpush.msra.mxu0 %v713
        %1189 = vmatpush.msra.mxu0 %v712
        %1190 = vmatpush.msra.mxu0 %v711
        %1191 = vmatpush.msra.mxu0 %v710
        %1192 = vmatpush.msra.mxu0 %v709
        %1193 = vmatpush.msra.mxu0 %v708
        %1194 = vmatpush.msra.mxu0 %v707
        %1195 = vmatmul.f32.gmra.mxu0 %v479
        %v1196 = vpop.f32.mrf.mxu0
        %v1197 = vadd.f32 %v1174, %v1196
        %1198 = vmatmul.f32.gmra.mxu0 %v503
        %v1199 = vpop.f32.mrf.mxu0
        %v1200 = vadd.f32 %v1177, %v1199
        %1201 = vdwg.mxu0
        %1202 = vmatpush.msra.mxu0 %v738
        %1203 = vmatpush.msra.mxu0 %v737
        %1204 = vmatpush.msra.mxu0 %v736
        %1205 = vmatpush.msra.mxu0 %v735
        %1206 = vmatpush.msra.mxu0 %v734
        %1207 = vmatpush.msra.mxu0 %v733
        %1208 = vmatpush.msra.mxu0 %v732
        %1209 = vmatpush.msra.mxu0 %v731
        %1210 = vmatpush.msra.mxu0 %v730
        %1211 = vmatpush.msra.mxu0 %v729
        %1212 = vmatpush.msra.mxu0 %v728
        %1213 = vmatpush.msra.mxu0 %v727
        %1214 = vmatpush.msra.mxu0 %v726
        %1215 = vmatpush.msra.mxu0 %v725
        %1216 = vmatpush.msra.mxu0 %v724
        %1217 = vmatpush.msra.mxu0 %v723
        %1218 = vmatmul.f32.gmra.mxu0 %v480
        %v1219 = vpop.f32.mrf.mxu0
        %v1220 = vadd.f32 %v1197, %v1219
        %1221 = vmatmul.f32.gmra.mxu0 %v504
        %v1222 = vpop.f32.mrf.mxu0
        %v1223 = vadd.f32 %v1200, %v1222
        %1224 = vdwg.mxu0
        %1225 = vmatpush.msra.mxu0 %v754
        %1226 = vmatpush.msra.mxu0 %v753
        %1227 = vmatpush.msra.mxu0 %v752
        %1228 = vmatpush.msra.mxu0 %v751
        %1229 = vmatpush.msra.mxu0 %v750
        %1230 = vmatpush.msra.mxu0 %v749
        %1231 = vmatpush.msra.mxu0 %v748
        %1232 = vmatpush.msra.mxu0 %v747
        %1233 = vmatpush.msra.mxu0 %v746
        %1234 = vmatpush.msra.mxu0 %v745
        %1235 = vmatpush.msra.mxu0 %v744
        %1236 = vmatpush.msra.mxu0 %v743
        %1237 = vmatpush.msra.mxu0 %v742
        %1238 = vmatpush.msra.mxu0 %v741
        %1239 = vmatpush.msra.mxu0 %v740
        %1240 = vmatpush.msra.mxu0 %v739
        %1241 = vmatmul.f32.gmra.mxu0 %v481
        %v1242 = vpop.f32.mrf.mxu0
        %v1243 = vadd.f32 %v1220, %v1242
        %1244 = vmatmul.f32.gmra.mxu0 %v505
        %v1245 = vpop.f32.mrf.mxu0
        %v1246 = vadd.f32 %v1223, %v1245
        %1247 = vdwg.mxu0
        %1248 = vmatpush.msra.mxu0 %v770
        %1249 = vmatpush.msra.mxu0 %v769
        %1250 = vmatpush.msra.mxu0 %v768
        %1251 = vmatpush.msra.mxu0 %v767
        %1252 = vmatpush.msra.mxu0 %v766
        %1253 = vmatpush.msra.mxu0 %v765
        %1254 = vmatpush.msra.mxu0 %v764
        %1255 = vmatpush.msra.mxu0 %v763
        %1256 = vmatpush.msra.mxu0 %v762
        %1257 = vmatpush.msra.mxu0 %v761
        %1258 = vmatpush.msra.mxu0 %v760
        %1259 = vmatpush.msra.mxu0 %v759
        %1260 = vmatpush.msra.mxu0 %v758
        %1261 = vmatpush.msra.mxu0 %v757
        %1262 = vmatpush.msra.mxu0 %v756
        %1263 = vmatpush.msra.mxu0 %v755
        %1264 = vmatmul.f32.gmra.mxu0 %v482
        %v1265 = vpop.f32.mrf.mxu0
        %v1266 = vadd.f32 %v1243, %v1265
        %1267 = vmatmul.f32.gmra.mxu0 %v506
        %v1268 = vpop.f32.mrf.mxu0
        %v1269 = vadd.f32 %v1246, %v1268
        %1270 = vdwg.mxu0
        %1271 = vmatpush.msra.mxu0 %v786
        %1272 = vmatpush.msra.mxu0 %v785
        %1273 = vmatpush.msra.mxu0 %v784
        %1274 = vmatpush.msra.mxu0 %v783
        %1275 = vmatpush.msra.mxu0 %v782
        %1276 = vmatpush.msra.mxu0 %v781
        %1277 = vmatpush.msra.mxu0 %v780
        %1278 = vmatpush.msra.mxu0 %v779
        %1279 = vmatpush.msra.mxu0 %v778
        %1280 = vmatpush.msra.mxu0 %v777
        %1281 = vmatpush.msra.mxu0 %v776
        %1282 = vmatpush.msra.mxu0 %v775
        %1283 = vmatpush.msra.mxu0 %v774
        %1284 = vmatpush.msra.mxu0 %v773
        %1285 = vmatpush.msra.mxu0 %v772
        %1286 = vmatpush.msra.mxu0 %v771
        %1287 = vmatmul.f32.gmra.mxu0 %v483
        %v1288 = vpop.f32.mrf.mxu0
        %v1289 = vadd.f32 %v1266, %v1288
        %1290 = vmatmul.f32.gmra.mxu0 %v507
        %v1291 = vpop.f32.mrf.mxu0
        %v1292 = vadd.f32 %v1269, %v1291
        %1293 = vdwg.mxu0
        %1294 = vmatpush.msra.mxu0 %v802
        %1295 = vmatpush.msra.mxu0 %v801
        %1296 = vmatpush.msra.mxu0 %v800
        %1297 = vmatpush.msra.mxu0 %v799
        %1298 = vmatpush.msra.mxu0 %v798
        %1299 = vmatpush.msra.mxu0 %v797
        %1300 = vmatpush.msra.mxu0 %v796
        %1301 = vmatpush.msra.mxu0 %v795
        %1302 = vmatpush.msra.mxu0 %v794
        %1303 = vmatpush.msra.mxu0 %v793
        %1304 = vmatpush.msra.mxu0 %v792
        %1305 = vmatpush.msra.mxu0 %v791
        %1306 = vmatpush.msra.mxu0 %v790
        %1307 = vmatpush.msra.mxu0 %v789
        %1308 = vmatpush.msra.mxu0 %v788
        %1309 = vmatpush.msra.mxu0 %v787
        %1310 = vmatmul.f32.gmra.mxu0 %v484
        %v1311 = vpop.f32.mrf.mxu0
        %v1312 = vadd.f32 %v1289, %v1311
        %1313 = vmatmul.f32.gmra.mxu0 %v508
        %v1314 = vpop.f32.mrf.mxu0
        %v1315 = vadd.f32 %v1292, %v1314
        %1316 = vdwg.mxu0
        %1317 = vmatpush.msra.mxu0 %v818
        %1318 = vmatpush.msra.mxu0 %v817
        %1319 = vmatpush.msra.mxu0 %v816
        %1320 = vmatpush.msra.mxu0 %v815
        %1321 = vmatpush.msra.mxu0 %v814
        %1322 = vmatpush.msra.mxu0 %v813
        %1323 = vmatpush.msra.mxu0 %v812
        %1324 = vmatpush.msra.mxu0 %v811
        %1325 = vmatpush.msra.mxu0 %v810
        %1326 = vmatpush.msra.mxu0 %v809
        %1327 = vmatpush.msra.mxu0 %v808
        %1328 = vmatpush.msra.mxu0 %v807
        %1329 = vmatpush.msra.mxu0 %v806
        %1330 = vmatpush.msra.mxu0 %v805
        %1331 = vmatpush.msra.mxu0 %v804
        %1332 = vmatpush.msra.mxu0 %v803
        %1333 = vmatmul.f32.gmra.mxu0 %v485
        %v1334 = vpop.f32.mrf.mxu0
        %v1335 = vadd.f32 %v1312, %v1334
        %1336 = vmatmul.f32.gmra.mxu0 %v509
        %v1337 = vpop.f32.mrf.mxu0
        %v1338 = vadd.f32 %v1315, %v1337
        %1339 = vdwg.mxu0
        %1340 = vmatpush.msra.mxu0 %v834
        %1341 = vmatpush.msra.mxu0 %v833
        %1342 = vmatpush.msra.mxu0 %v832
        %1343 = vmatpush.msra.mxu0 %v831
        %1344 = vmatpush.msra.mxu0 %v830
        %1345 = vmatpush.msra.mxu0 %v829
        %1346 = vmatpush.msra.mxu0 %v828
        %1347 = vmatpush.msra.mxu0 %v827
        %1348 = vmatpush.msra.mxu0 %v826
        %1349 = vmatpush.msra.mxu0 %v825
        %1350 = vmatpush.msra.mxu0 %v824
        %1351 = vmatpush.msra.mxu0 %v823
        %1352 = vmatpush.msra.mxu0 %v822
        %1353 = vmatpush.msra.mxu0 %v821
        %1354 = vmatpush.msra.mxu0 %v820
        %1355 = vmatpush.msra.mxu0 %v819
        %1356 = vmatmul.f32.gmra.mxu0 %v486
        %v1357 = vpop.f32.mrf.mxu0
        %v1358 = vadd.f32 %v1335, %v1357
        %1359 = vmatmul.f32.gmra.mxu0 %v510
        %v1360 = vpop.f32.mrf.mxu0
        %v1361 = vadd.f32 %v1338, %v1360
        %1362 = vdwg.mxu0
        %1363 = vmatpush.msra.mxu0 %v850
        %1364 = vmatpush.msra.mxu0 %v849
        %1365 = vmatpush.msra.mxu0 %v848
        %1366 = vmatpush.msra.mxu0 %v847
        %1367 = vmatpush.msra.mxu0 %v846
        %1368 = vmatpush.msra.mxu0 %v845
        %1369 = vmatpush.msra.mxu0 %v844
        %1370 = vmatpush.msra.mxu0 %v843
        %1371 = vmatpush.msra.mxu0 %v842
        %1372 = vmatpush.msra.mxu0 %v841
        %1373 = vmatpush.msra.mxu0 %v840
        %1374 = vmatpush.msra.mxu0 %v839
        %1375 = vmatpush.msra.mxu0 %v838
        %1376 = vmatpush.msra.mxu0 %v837
        %1377 = vmatpush.msra.mxu0 %v836
        %1378 = vmatpush.msra.mxu0 %v835
        %1379 = vmatmul.f32.gmra.mxu0 %v487
        %v1380 = vpop.f32.mrf.mxu0
        %v1381 = vadd.f32 %v1358, %v1380
        %1382 = vmatmul.f32.gmra.mxu0 %v511
        %v1383 = vpop.f32.mrf.mxu0
        %v1384 = vadd.f32 %v1361, %v1383
        %1385 = vdwg.mxu0
        %1386 = vmatpush.msra.mxu0 %v866
        %1387 = vmatpush.msra.mxu0 %v865
        %1388 = vmatpush.msra.mxu0 %v864
        %1389 = vmatpush.msra.mxu0 %v863
        %1390 = vmatpush.msra.mxu0 %v862
        %1391 = vmatpush.msra.mxu0 %v861
        %1392 = vmatpush.msra.mxu0 %v860
        %1393 = vmatpush.msra.mxu0 %v859
        %1394 = vmatpush.msra.mxu0 %v858
        %1395 = vmatpush.msra.mxu0 %v857
        %1396 = vmatpush.msra.mxu0 %v856
        %1397 = vmatpush.msra.mxu0 %v855
        %1398 = vmatpush.msra.mxu0 %v854
        %1399 = vmatpush.msra.mxu0 %v853
        %1400 = vmatpush.msra.mxu0 %v852
        %1401 = vmatpush.msra.mxu0 %v851
        %1402 = vmatmul.f32.gmra.mxu0 %v488
        %v1403 = vpop.f32.mrf.mxu0
        %v1404 = vadd.f32 %v1381, %v1403
        %1405 = vmatmul.f32.gmra.mxu0 %v512
        %v1406 = vpop.f32.mrf.mxu0
        %v1407 = vadd.f32 %v1384, %v1406
        %1408 = vdwg.mxu0
        %1409 = vmatpush.msra.mxu0 %v882
        %1410 = vmatpush.msra.mxu0 %v881
        %1411 = vmatpush.msra.mxu0 %v880
        %1412 = vmatpush.msra.mxu0 %v879
        %1413 = vmatpush.msra.mxu0 %v878
        %1414 = vmatpush.msra.mxu0 %v877
        %1415 = vmatpush.msra.mxu0 %v876
        %1416 = vmatpush.msra.mxu0 %v875
        %1417 = vmatpush.msra.mxu0 %v874
        %1418 = vmatpush.msra.mxu0 %v873
        %1419 = vmatpush.msra.mxu0 %v872
        %1420 = vmatpush.msra.mxu0 %v871
        %1421 = vmatpush.msra.mxu0 %v870
        %1422 = vmatpush.msra.mxu0 %v869
        %1423 = vmatpush.msra.mxu0 %v868
        %1424 = vmatpush.msra.mxu0 %v867
        %1425 = vmatmul.f32.gmra.mxu0 %v489
        %v1426 = vpop.f32.mrf.mxu0
        %v1427 = vadd.f32 %v1404, %v1426
        %1428 = vmatmul.f32.gmra.mxu0 %v513
        %v1429 = vpop.f32.mrf.mxu0
        %v1430 = vadd.f32 %v1407, %v1429
        %1431 = vdwg.mxu0
        %1432 = vmatpush.msra.mxu0 %v898
        %1433 = vmatpush.msra.mxu0 %v897
        %1434 = vmatpush.msra.mxu0 %v896
        %1435 = vmatpush.msra.mxu0 %v895
        %1436 = vmatpush.msra.mxu0 %v894
        %1437 = vmatpush.msra.mxu0 %v893
        %1438 = vmatpush.msra.mxu0 %v892
        %1439 = vmatpush.msra.mxu0 %v891
        %1440 = vmatpush.msra.mxu0 %v890
        %1441 = vmatpush.msra.mxu0 %v889
        %1442 = vmatpush.msra.mxu0 %v888
        %1443 = vmatpush.msra.mxu0 %v887
        %1444 = vmatpush.msra.mxu0 %v886
        %1445 = vmatpush.msra.mxu0 %v885
        %1446 = vmatpush.msra.mxu0 %v884
        %1447 = vmatpush.msra.mxu0 %v883
        %1448 = vmatmul.f32.gmra.mxu0 %v490
        %v1449 = vpop.f32.mrf.mxu0
        %v1450 = vadd.f32 %v1427, %v1449
        %1451 = vmatmul.f32.gmra.mxu0 %v514
        %v1452 = vpop.f32.mrf.mxu0
        %v1453 = vadd.f32 %v1430, %v1452
        %1454 = vdwg.mxu0
        %v1455 = vadd.f32 %v1450, %v1453
        %v1456 = vrot.slane %v1455, 4
        %v1457 = vadd.f32 %v1455, %v1456
        %v1458 = vrot.slane %v1457, 2
        %v1459 = vadd.f32 %v1457, %v1458
        %v1460 = vrot.slane %v1459, 1
        %v1461 = vadd.f32 %v1459, %v1460
        %v1462 = vrcp.pop 16.0
        %v1463 = vmul.f32 16.0, %v1462
        %v1464 = vsub.f32 1.0, %v1463
        %v1465 = vmul.f32 %v1462, %v1464
        %v1466 = vadd.f32 %v1462, %v1465
        %vm1467 = vweird.f32 %v1462
        %v1468 = vsel %vm1467, %v1462, %v1466
        %v1469 = vmul.f32 %v1461, %v1468
        %v1470 = vsub.f32 %v1450, %v1469
        %v1471 = vsub.f32 %v1453, %v1469
        %v1472 = vmul.f32 %v1470, %v1470
        %v1473 = vmul.f32 %v1471, %v1471
        %v1474 = vadd.f32 %v1472, %v1473
        %v1475 = vrot.slane %v1474, 4
        %v1476 = vadd.f32 %v1474, %v1475
        %v1477 = vrot.slane %v1476, 2
        %v1478 = vadd.f32 %v1476, %v1477
        %v1479 = vrot.slane %v1478, 1
        %v1480 = vadd.f32 %v1478, %v1479
        %v1481 = vrcp.pop 15.0
        %v1482 = vmul.f32 15.0, %v1481
        %v1483 = vsub.f32 1.0, %v1482
        %v1484 = vmul.f32 %v1481, %v1483
        %v1485 = vadd.f32 %v1481, %v1484
        %vm1486 = vweird.f32 %v1481
        %v1487 = vsel %vm1486, %v1481, %v1485
        %v1488 = vmul.f32 %v1480, %v1487
        %v1489 = vadd.f32 %v1488, 1e-05
        %v1490 = vrsqrt.pop %v1489
        %v1491 = vmul.f32 %v1490, %v1489
        %v1492 = vmul.f32 %v1491, %v1490
        %v1493 = vmul.f32 0.5, %v1492
        %v1494 = vsub.f32 1.5, %v1493
        %v1495 = vmul.f32 %v1490, %v1494
        %vm1496 = vweird.f32 %v1489
        %vm1497 = vweird.f32 %v1490
        %vm1498 = vmor %vm1496, %vm1497
        %v1499 = vsel %vm1498, %v1490, %v1495
        %v1500 = vld [vmem:[%s392] sm:$0x1]
        %v1501 = vmul.f32 %v1470, %v1499
        %v1502 = vmul.f32 %v1471, %v1499
        %v1504 = vperm.slane %v1500, 0
        %v1506 = vmul.f32 %v1504, %v1501
        %v1507 = vmul.f32 %v1504, %v1502
        %v1508 = vld [vmem:[%s401] sm:$0x1]
        %v1510 = vperm.slane %v1508, 0
        %v1512 = vadd.f32 %v1506, %v1510
        %v1513 = vadd.f32 %v1507, %v1510
        %v1514 = vmax.f32 %v1512, 0.0
        %v1515 = vmax.f32 %v1513, 0.0
        %v1516 = vlaneseq
        %v1517 = vshrl.u32 %v1516, 7
        %v1518 = vadd.s32 %v1517, 8
        %v1519 = vlaneseq
        %v1520 = vand.u32 %v1519, 127
        %v1521 = vmul.u32 %v1517, 256
        %v1522 = vmul.u32 %v1518, 256
        %s1523 = smul.u32 %s31, 128
        %v1524 = vstv %s1523
        %v1525 = vadd.s32 %v1524, %v1520
        %v1526 = vadd.s32 %v1521, %v1525
        %v1527 = vadd.s32 %v1522, %v1525
        %s1528 = sld [smem:[#allocation4]]
        %s1529 = smul.u32 %s1528, 2654435769
        %v1530 = vstv %s1529
        %v1531 = vxor.u32 %v1526, %v1530
        %v1532 = vxor.u32 %v1527, %v1530
        %v1533 = vshrl.u32 %v1531, 16
        %v1534 = vshrl.u32 %v1532, 16
        %v1535 = vxor.u32 %v1531, %v1533
        %v1536 = vxor.u32 %v1532, %v1534
        %v1537 = vmul.u32 %v1535, 2246822507
        %v1538 = vmul.u32 %v1536, 2246822507
        %v1539 = vshrl.u32 %v1537, 13
        %v1540 = vshrl.u32 %v1538, 13
        %v1541 = vxor.u32 %v1537, %v1539
        %v1542 = vxor.u32 %v1538, %v1540
        %v1543 = vmul.u32 %v1541, 3266489909
        %v1544 = vmul.u32 %v1542, 3266489909
        %v1545 = vshrl.u32 %v1543, 16
        %v1546 = vshrl.u32 %v1544, 16
        %v1547 = vxor.u32 %v1543, %v1545
        %v1548 = vxor.u32 %v1544, %v1546
        %v1549 = vshrl.u32 %v1547, 8
        %v1550 = vshrl.u32 %v1548, 8
        %v1551 = vadd.s32 %v1549, 2147483648
        %vm1553 = vcmp.lt.s32.totalorder %v1551, 2155872256
        %v1554 = vadd.s32 %v1550, 2147483648
        %vm1556 = vcmp.lt.s32.totalorder %v1554, 2155872256
        %v1557 = vmul.f32 %v1514, 2.0
        %v1558 = vmul.f32 %v1515, 2.0
        %v1559 = vsel %vm1553, %v1557, 0.0
        %v1560 = vsel %vm1556, %v1558, 0.0
        %v1561 = vld [vmem:[#allocation2] sm:$0xff]
        %v1562 = vld [vmem:[#allocation2 + $0x8] sm:$0xff]
        %v1563 = vld [vmem:[%s411] sm:$0xff]
        %v1564 = vld [vmem:[%s411 + $0x8] sm:$0xff]
        %v1565 = vld [vmem:[%s411 + $0x10] sm:$0xff]
        %v1566 = vld [vmem:[%s411 + $0x18] sm:$0xff]
        %v1567 = vld [vmem:[%s411 + $0x20] sm:$0xff]
        %v1568 = vld [vmem:[%s411 + $0x28] sm:$0xff]
        %v1569 = vld [vmem:[%s411 + $0x30] sm:$0xff]
        %v1570 = vld [vmem:[%s411 + $0x38] sm:$0xff]
        %v1571 = vld [vmem:[%s411 + $0x40] sm:$0xff]
        %v1572 = vld [vmem:[%s411 + $0x48] sm:$0xff]
        %v1573 = vld [vmem:[%s411 + $0x50] sm:$0xff]
        %v1574 = vld [vmem:[%s411 + $0x58] sm:$0xff]
        %v1575 = vld [vmem:[%s411 + $0x60] sm:$0xff]
        %v1576 = vld [vmem:[%s411 + $0x68] sm:$0xff]
        %v1577 = vld [vmem:[%s411 + $0x70] sm:$0xff]
        %v1578 = vld [vmem:[%s411 + $0x78] sm:$0xff]
        %1579 = vmatpush.msra.mxu0 %v1578
        %1580 = vmatpush.msra.mxu0 %v1577
        %1581 = vmatpush.msra.mxu0 %v1576
        %1582 = vmatpush.msra.mxu0 %v1575
        %1583 = vmatpush.msra.mxu0 %v1574
        %1584 = vmatpush.msra.mxu0 %v1573
        %1585 = vmatpush.msra.mxu0 %v1572
        %1586 = vmatpush.msra.mxu0 %v1571
        %1587 = vmatpush.msra.mxu0 %v1570
        %1588 = vmatpush.msra.mxu0 %v1569
        %1589 = vmatpush.msra.mxu0 %v1568
        %1590 = vmatpush.msra.mxu0 %v1567
        %1591 = vmatpush.msra.mxu0 %v1566
        %1592 = vmatpush.msra.mxu0 %v1565
        %1593 = vmatpush.msra.mxu0 %v1564
        %1594 = vmatpush.msra.mxu0 %v1563
        %1595 = vmatmul.f32.gmra.mxu0 %v1559
        %v1596 = vpop.f32.mrf.mxu0
        %v1597 = vadd.f32 0.0, %v1596
        %1598 = vmatmul.f32.gmra.mxu0 %v1560
        %v1599 = vpop.f32.mrf.mxu0
        %v1600 = vadd.f32 0.0, %v1599
        %1601 = vdwg.mxu0
        %v1602 = vadd.f32 %v1561, %v1597
        %v1603 = vadd.f32 %v1562, %v1600
        %1604 = vst [vmem:[#allocation2] sm:$0xff] %v1602
        %1605 = vst [vmem:[#allocation2 + $0x8] sm:$0xff] %v1603
        %p1606 = scmp.eq.s32.totalorder %s31, 1
        // Predicated region
        $region81: #{tpu_custom_call.1} parent=47 // pred_check
          %p1607 = pneg %p1606
        $region82: #{tpu_custom_call.1} parent=47 // pred_check_branch
          %1609 = sbr.rel (%p1607) target = $region84
        $region83: #{tpu_custom_call.1} parent=47 // pred_region
          %v1610 = vld [vmem:[#allocation2] sm:$0xff]
          %v1611 = vld [vmem:[#allocation2 + $0x8] sm:$0xff]
          %v1612 = vld [vmem:[#allocation16] sm:$0x1]
          %v1614 = vperm.slane %v1612, 0
          %v1616 = vadd.f32 %v1610, %v1614
          %v1617 = vadd.f32 %v1611, %v1614
          %1618 = vst [vmem:[#allocation17] sm:$0xff] %v1616
          %1619 = vst [vmem:[#allocation17 + $0x8] sm:$0xff] %v1617
        $region84: #{tpu_custom_call.1} parent=47 // pred_fallthru
          _
        // Predicated region
        $region85: #{tpu_custom_call.1} parent=47 // pred_check
          %p1620 = pneg %p216
        $region86: #{tpu_custom_call.1} parent=47 // pred_check_branch
          %1622 = sbr.rel (%p1620) target = $region88
        $region87: #{tpu_custom_call.1} parent=47 // pred_region
          %1624 = vsyncadd [#allocation7], 0
          %s1625 = sshll.u32 [#allocation17], 4
          %s1626 = int_to_ptr.vmem [resolvable:$true] %s1625
          %s1627 = sshll.u32 %s8, 4
          %s1628 = int_to_ptr.hbm [resolvable:$true] %s1627
          %1633 = dma.vmem_to_hbm [thread:$0]  %s1626, 256, %s1628, [#allocation7], 128, 128, 8
        $region88: #{tpu_custom_call.1} parent=47 // pred_fallthru
          _
        // Predicated region
        $region89: #{tpu_custom_call.1} parent=47 // pred_check
          %p1634 = pneg %p216
        $region90: #{tpu_custom_call.1} parent=47 // pred_check_branch
          %1636 = sbr.rel (%p1634) target = $region92
        $region91: #{tpu_custom_call.1} parent=47 // pred_region
          %1638 = dma.done [#allocation7], 256
        $region92: #{tpu_custom_call.1} parent=47 // pred_fallthru
          _
      $region48: #{tpu_custom_call.1} parent=5 // pred_fallthru
        _
      %p1639 = scmp.le.s32.totalorder 2, %s26
      // Predicated region
      $region93: #{tpu_custom_call.1} parent=5 // pred_check
        %p1640 = pneg %p1639
      $region94: #{tpu_custom_call.1} parent=5 // pred_check_branch
        %1642 = sbr.rel (%p1640) target = $region96
      $region95: #{tpu_custom_call.1} parent=5 // pred_region
        %s1643 = ssub.s32 %s26, 2
      $region96: #{tpu_custom_call.1} parent=5 // pred_fallthru
        _
    $region6: #{tpu_custom_call.1} parent=1 // loop_footer
      %s30 = sadd.s32 1, %s26
    $region7: #{tpu_custom_call.1} parent=1 // loop_footer_branch
      %25 = sbr.rel target = $region3
    $region8: #{tpu_custom_call.1} parent=1 // loop_exit
      _
    %1644 = vsyncpa [#allocation6], 1
    %s1645 = scalar_lea.sflag [#allocation6], 1
    %1646 = vsyncpa %s1645, 1
    %1647 = vsyncpa [#allocation9], 1
    %s1648 = scalar_lea.sflag [#allocation9], 1
    %1649 = vsyncpa %s1648, 1
    %1650 = vsyncpa [#allocation12], 1
    %s1651 = scalar_lea.sflag [#allocation12], 1
    %1652 = vsyncpa %s1651, 1
    %1653 = vsyncpa [#allocation15], 1
    %s1654 = scalar_lea.sflag [#allocation15], 1
    %1655 = vsyncpa %s1654, 1
    %1656 = vsyncpa [#allocation7], 1
    %s1657 = scalar_lea.sflag [#allocation7], 1
    %1658 = vsyncpa %s1657, 1

</llo_original>
